<compile_context>
chip_gen: v5e
topology: v5e:2x2
jax: 0.10.0
libtpu: 0.0.40
codegen_flags: <defaults>
</compile_context>

<pallas_src>
import functools

import jax
import jax.numpy as jnp
from jax.experimental import pallas as pl
from jax.experimental.pallas import tpu as pltpu

LANES = 128

# PokerPlayerNetV1 architecture constants (fixed by the torch module).
PG_IDIM, PG_HDIM, PG_ODIM, PG_NH = 7, 10, 10, 2
HIST_IDIM, HIST_HDIM, HIST_ODIM, HIST_NH = 3, 20, 20, 3
GATHER_IDIM, GATHER_HDIM, GATHER_ODIM, GATHER_NH = 60, 30, 4, 3
N_STAGES, STAGE_EDIM = 4, 10
N_PLAYERS = 9
GROUPS = 3                    # row groups: 3 players per 128-lane tile
PPG = N_PLAYERS // GROUPS     # players per group = 3
HBLK = HIST_HDIM              # 20 lanes per (player, net) diagonal block
NEG_INF = -1e10


def _round_up(x, m):
    return ((x + m - 1) // m) * m


# ---------------------------------------------------------------------------
# Fused kernel
# ---------------------------------------------------------------------------
def _dot(a, w):
    """MXU matmul: activations cast to weight dtype (bf16 fast path), f32 accumulate."""
    return jnp.dot(a.astype(w.dtype), w, preferred_element_type=jnp.float32)


def _ffn_chain(x, w_ref, b_ref):
    """Linear, then (ReLU, Linear) for each remaining layer."""
    for l in range(w_ref.shape[0]):
        if l > 0:
            x = jnp.maximum(x, 0.0)
        x = _dot(x, w_ref[l]) + b_ref[l]
    return x


def _poker_kernel(x_pg_ref, x_hist_ref, emb_ref,
                  pg_w_ref, pg_b_ref, hist_w_ref, hist_b_ref,
                  gw_ref, gb_ref, o_ref):
    bm = x_pg_ref.shape[0]
    x_pg = x_pg_ref[...]                                   # (bm, 128) f32

    # player_game FFN; its last Linear is pre-composed with the gather layer-0
    # pg block (+ gather layer-0 bias) => output already in gather hidden lanes 0..29.
    pg_h = _ffn_chain(x_pg, pg_w_ref, pg_b_ref)

    # Both history nets, all 9 players, block-diagonal in 128 lanes, 3 row groups.
    # One (3*bm,128)x(128,128) matmul per layer.  The last layer is pre-composed
    # with the gather layer-0 acted/to_act blocks, so after summing the 3 row
    # groups we already have the summed history contribution in lanes 0..29.
    xh = x_hist_ref[...].reshape(GROUPS * bm, LANES)
    hh = _ffn_chain(xh, hist_w_ref, hist_b_ref)
    hist_h = hh.reshape(GROUPS, bm, LANES).sum(axis=0)     # (bm, 128)

    # Stage embedding already folded through gather layer 0 on the host (4x30
    # table); select the row on the VPU instead of a one-hot MXU matmul.
    stage = x_pg[:, 0:1].astype(jnp.int32)
    emb_h = jnp.where(
        stage == 0, emb_ref[0:1, :],
        jnp.where(stage == 1, emb_ref[1:2, :],
                  jnp.where(stage == 2, emb_ref[2:3, :], emb_ref[3:4, :])))

    # gather layer-0 output (concat folded away), then remaining gather layers.
    h = pg_h + hist_h + emb_h
    for l in range(gw_ref.shape[0]):
        h = jnp.maximum(h, 0.0)
        h = _dot(h, gw_ref[l]) + gb_ref[l]
    # h lanes: 0..2 action logits, 3 raise size, rest zero-padded.

    # Head: mask the "raise" logit and clamp the raise size (clamp_ste forward).
    rel_stack = x_pg[:, 1:2]
    min_allowed_bet = x_pg[:, 2:3]
    min_bet_to_continue = x_pg[:, PG_IDIM - 1:PG_IDIM]
    min_allowed_raise = min_bet_to_continue + min_allowed_bet
    cannot_raise = rel_stack <= min_allowed_raise          # (bm, 1) bool

    lane = jax.lax.broadcasted_iota(jnp.int32, h.shape, 1)
    h = jnp.where((lane == 2) & cannot_raise, NEG_INF, h)
    clamped = jnp.minimum(jnp.maximum(h, min_allowed_raise), rel_stack)
    h = jnp.where(lane == 3, clamped, h)

    o_ref[...] = h.astype(o_ref.dtype)


# ---------------------------------------------------------------------------
# Parameters
# ---------------------------------------------------------------------------
def init_params(key):
    """Synthetic params mimicking PyTorch defaults (Linear: U(+-1/sqrt(fan_in)), Embedding: N(0,1))."""
    def linear(k, din, dout):
        kw, kb = jax.random.split(k)
        bound = 1.0 / (din ** 0.5)
        w = jax.random.uniform(kw, (dout, din), jnp.float32, -bound, bound)
        b = jax.random.uniform(kb, (dout,), jnp.float32, -bound, bound)
        return w, b

    def ffn(k, idim, hdim, odim, n_hidden):
        dims = [(idim, hdim)] + [(hdim, hdim)] * n_hidden + [(hdim, odim)]
        keys = jax.random.split(k, len(dims))
        return [linear(kk, din, dout) for kk, (din, dout) in zip(keys, dims)]

    k_pg, k_a, k_t, k_g, k_e = jax.random.split(key, 5)
    return {
        "pg": ffn(k_pg, PG_IDIM, PG_HDIM, PG_ODIM, PG_NH),
        "acted": ffn(k_a, HIST_IDIM, HIST_HDIM, HIST_ODIM, HIST_NH),
        "toact": ffn(k_t, HIST_IDIM, HIST_HDIM, HIST_ODIM, HIST_NH),
        "gather": ffn(k_g, GATHER_IDIM, GATHER_HDIM, GATHER_ODIM, GATHER_NH),
        "embed": jax.random.normal(k_e, (N_STAGES, STAGE_EDIM), jnp.float32),
    }


def pack_params(raw, matmul_dtype=jnp.bfloat16):
    """Fold concat/sum/embedding into the weights and pack everything into lane-dense tiles.

    * Gather layer 0 is linearly composed into each sub-net's last Linear (exact).
    * The two history nets and 3 players share one block-diagonal 128-lane tile set.
    * Weights stored in `matmul_dtype` (bf16 MXU fast path); biases / folded
      embedding table stay f32.
    """
    def pad2(m, rows=LANES, cols=LANES):
        out = jnp.zeros((rows, cols), jnp.float32)
        m = jnp.asarray(m, jnp.float32)
        return out.at[:m.shape[0], :m.shape[1]].set(m)

    def pad_bias(b):
        return pad2(jnp.asarray(b, jnp.float32)[None, :], 1, LANES)

    # gather layer 0, split by the torch concat order [pg(10), emb(10), acted(20), to_act(20)].
    wg0, bg0 = raw["gather"][0]                                   # (30, 60), (30,)
    Wg_pg = wg0[:, :PG_ODIM]
    Wg_emb = wg0[:, PG_ODIM:PG_ODIM + STAGE_EDIM]
    Wg_a = wg0[:, PG_ODIM + STAGE_EDIM:PG_ODIM + STAGE_EDIM + HIST_ODIM]
    Wg_t = wg0[:, PG_ODIM + STAGE_EDIM + HIST_ODIM:]

    # player_game net: last Linear composed with the gather pg block + gather layer-0 bias.
    pg_ws = [pad2(w.T) for w, _ in raw["pg"][:-1]]
    pg_bs = [pad_bias(b) for _, b in raw["pg"][:-1]]
    wL, bL = raw["pg"][-1]
    pg_ws.append(pad2((Wg_pg @ wL).T))
    pg_bs.append(pad_bias(Wg_pg @ bL + bg0))
    pg_w = jnp.stack(pg_ws).astype(matmul_dtype)
    pg_b = jnp.stack(pg_bs)

    # merged history net: within each 128-lane tile, player j in {0,1,2} owns
    # lanes [40j, 40j+20) for acted and [40j+20, 40j+40) for to_act.
    n_hist_layers = HIST_NH + 2
    hist_ws, hist_bs = [], []
    for l in range(n_hist_layers):
        wa, ba = raw["acted"][l]
        wt, bt = raw["toact"][l]
        last = (l == n_hist_layers - 1)
        if last:
            wa_f, ba_f = Wg_a @ wa, Wg_a @ ba                     # (30,20), (30,)
            wt_f, bt_f = Wg_t @ wt, Wg_t @ bt
        W = jnp.zeros((LANES, LANES), jnp.float32)
        b = jnp.zeros((LANES,), jnp.float32)
        for j in range(PPG):
            ra = 2 * j * HBLK                                     # acted block offset
            rt = ra + HBLK                                        # to_act block offset
            if l == 0:
                W = W.at[ra:ra + HIST_IDIM, ra:ra + HIST_HDIM].set(wa.T)
                W = W.at[rt:rt + HIST_IDIM, rt:rt + HIST_HDIM].set(wt.T)
                b = b.at[ra:ra + HIST_HDIM].set(ba)
                b = b.at[rt:rt + HIST_HDIM].set(bt)
            elif not last:
                W = W.at[ra:ra + HIST_HDIM, ra:ra + HIST_HDIM].set(wa.T)
                W = W.at[rt:rt + HIST_HDIM, rt:rt + HIST_HDIM].set(wt.T)
                b = b.at[ra:ra + HIST_HDIM].set(ba)
                b = b.at[rt:rt + HIST_HDIM].set(bt)
            else:
                # fold into gather hidden lanes 0..29
                W = W.at[ra:ra + HIST_HDIM, :GATHER_HDIM].set(wa_f.T)
                W = W.at[rt:rt + HIST_HDIM, :GATHER_HDIM].set(wt_f.T)
        if last:
            # bias added once per row group; 3 row groups are summed => x9 players total.
            b = b.at[:GATHER_HDIM].set(PPG * (ba_f + bt_f))
        hist_ws.append(W)
        hist_bs.append(b[None, :])
    hist_w = jnp.stack(hist_ws).astype(matmul_dtype)
    hist_b = jnp.stack(hist_bs)

    # remaining gather layers (1..4).
    gw = jnp.stack([pad2(w.T) for w, _ in raw["gather"][1:]]).astype(matmul_dtype)
    gb = jnp.stack([pad_bias(b) for _, b in raw["gather"][1:]])

    # stage embedding folded through gather layer 0 (4 x 30), kept f32 for the VPU select.
    emb = pad2(raw["embed"] @ Wg_emb.T, 8, LANES)

    return dict(emb=emb, pg_w=pg_w, pg_b=pg_b, hist_w=hist_w, hist_b=hist_b,
                gw=gw, gb=gb)


# ---------------------------------------------------------------------------
# Forward wrapper
# ---------------------------------------------------------------------------
@functools.partial(jax.jit, static_argnames=("block_rows",))
def poker_forward(packed, x_player_game, x_acted_history, x_to_act_history,
                  block_rows=512):
    """Fused PokerPlayerNetV1 forward.  Returns (action_logits [B,3], raise_size [B])."""
    B = x_player_game.shape[0]
    assert x_acted_history.shape[1] == N_PLAYERS
    assert x_to_act_history.shape[1] == N_PLAYERS

    # Row tile: multiple of 16 (bf16 row packing); >=2 grid blocks when possible
    # so the "parallel" axis actually shards over v7x's two TensorCores.
    bm = max(16, _round_up(min(block_rows, (B + 1) // 2), 16))
    n_blocks = pl.cdiv(B, bm)
    Bp = n_blocks * bm

    hist_dtype = packed["hist_w"].dtype     # stream history in the matmul dtype

    # player_game features stay f32 (stage index + exact clamp/mask bounds).
    x_pg_p = jnp.zeros((Bp, LANES), jnp.float32)
    x_pg_p = x_pg_p.at[:B, :PG_IDIM].set(x_player_game.astype(jnp.float32))

    # History: 3 row groups x 3 players x {acted, to_act} packed into 128 lanes.
    xa = x_acted_history.astype(jnp.float32)
    xt = x_to_act_history.astype(jnp.float32)
    x_hist = jnp.zeros((GROUPS, Bp, LANES), jnp.float32)
    for g in range(GROUPS):
        for j in range(PPG):
            p = g * PPG + j
            ra = 2 * j * HBLK
            rt = ra + HBLK
            x_hist = x_hist.at[g, :B, ra:ra + HIST_IDIM].set(xa[:, p, :])
            x_hist = x_hist.at[g, :B, rt:rt + HIST_IDIM].set(xt[:, p, :])
    x_hist = x_hist.astype(hist_dtype)

    row_spec = pl.BlockSpec((bm, LANES), lambda i: (i, 0))
    hist_spec = pl.BlockSpec((GROUPS, bm, LANES), lambda i: (0, i, 0))

    def resident(arr):
        # Constant index_map -> weights DMA'd once, resident across row blocks.
        return pl.BlockSpec(arr.shape, lambda i: (0,) * arr.ndim)

    # MXU row-passes per batch row: pg(4) + merged history(3 groups x 5) + gather tail(4).
    n_row_passes = (PG_NH + 2) + GROUPS * (HIST_NH + 2) + (GATHER_NH + 1)
    flops = 2 * Bp * n_row_passes * LANES * LANES
    weight_bytes = sum(int(v.size) * v.dtype.itemsize for v in packed.values())
    bytes_accessed = (int(x_pg_p.size) * 4
                      + int(x_hist.size) * x_hist.dtype.itemsize
                      + Bp * LANES * 4 + weight_bytes)

    out_pad = pl.pallas_call(
        _poker_kernel,
        out_shape=jax.ShapeDtypeStruct((Bp, LANES), jnp.float32),
        grid_spec=pltpu.PrefetchScalarGridSpec(
            num_scalar_prefetch=0,
            grid=(n_blocks,),
            in_specs=[
                row_spec, hist_spec,
                resident(packed["emb"]),
                resident(packed["pg_w"]), resident(packed["pg_b"]),
                resident(packed["hist_w"]), resident(packed["hist_b"]),
                resident(packed["gw"]), resident(packed["gb"]),
            ],
            out_specs=pl.BlockSpec((bm, LANES), lambda i: (i, 0)),
        ),
        compiler_params=pltpu.CompilerParams(
            dimension_semantics=("parallel",),
            vmem_limit_bytes=32 * 1024 * 1024,
        ),
        cost_estimate=pl.CostEstimate(flops=int(flops), transcendentals=0,
                                      bytes_accessed=int(bytes_accessed)),
    )(x_pg_p, x_hist,
      packed["emb"], packed["pg_w"], packed["pg_b"],
      packed["hist_w"], packed["hist_b"], packed["gw"], packed["gb"])

    action_logits = out_pad[:B, :GATHER_ODIM - 1]
    raise_size = out_pad[:B, GATHER_ODIM - 1]
    return action_logits, raise_size


# ---------------------------------------------------------------------------
# Plain-JAX reference (mirrors PokerPlayerNetV1.forward, use_batchnorm=False)
# ---------------------------------------------------------------------------
def reference_forward(raw, x_player_game, x_acted_history, x_to_act_history):
    def ffn(x, layers):
        for i, (w, b) in enumerate(layers):
            if i > 0:
                x = jnp.maximum(x, 0.0)
            x = x @ w.T + b
        return x

    pg_state = ffn(x_player_game, raw["pg"])
    acted_state = ffn(x_acted_history, raw["acted"]).sum(axis=1)
    toact_state = ffn(x_to_act_history, raw["toact"]).sum(axis=1)
    stage = x_player_game[:, 0].astype(jnp.int32)
    stage_emb = raw["embed"][stage]
    all_state = jnp.concatenate(
        [pg_state, stage_emb, acted_state, toact_state], axis=-1)
    out = ffn(all_state, raw["gather"])

    action_logits = out[:, :-1]
    raise_size = out[:, -1]
    rel_stack = x_player_game[:, 1]
    min_allowed_raise = x_player_game[:, -1] + x_player_game[:, 2]
    cannot_raise = rel_stack <= min_allowed_raise
    action_logits = action_logits.at[:, 2].set(
        jnp.where(cannot_raise, NEG_INF, action_logits[:, 2]))
    raise_size = jnp.minimum(jnp.maximum(raise_size, min_allowed_raise), rel_stack)
    return action_logits, raise_size


if __name__ == "__main__":
    key = jax.random.PRNGKey(0)
    k_params, k_stage, k_pg, k_act, k_ta = jax.random.split(key, 5)

    B = 16  # matches the torch module's default DataLoader batch size
    raw = init_params(k_params)

    stage = jax.random.randint(k_stage, (B, 1), 0, N_STAGES).astype(jnp.float32)
    pg_rest = jax.random.uniform(k_pg, (B, PG_IDIM - 1), jnp.float32)
    x_player_game = jnp.concatenate([stage, pg_rest], axis=1)                 # (16, 7)
    x_acted_history = jax.random.uniform(k_act, (B, N_PLAYERS, HIST_IDIM))    # (16, 9, 3)
    x_to_act_history = jax.random.uniform(k_ta, (B, N_PLAYERS, HIST_IDIM))    # (16, 9, 3)

    ref_logits, ref_raise = reference_forward(
        raw, x_player_game, x_acted_history, x_to_act_history)

    # f32 weight pack: tight correctness check against the plain-JAX reference.
    packed_f32 = pack_params(raw, matmul_dtype=jnp.float32)
    logits_f32, raise_f32 = poker_forward(
        packed_f32, x_player_game, x_acted_history, x_to_act_history)
    jax.block_until_ready((logits_f32, raise_f32))
    assert logits_f32.shape == (B, 3) and raise_f32.shape == (B,)
    assert jnp.allclose(logits_f32, ref_logits, atol=5e-3, rtol=5e-3)
    assert jnp.allclose(raise_f32, ref_raise, atol=5e-3, rtol=5e-3)

    # bf16 weight + history-input pack (v6e/v7x MXU fast path, f32 accumulate).
    packed_bf16 = pack_params(raw, matmul_dtype=jnp.bfloat16)
    logits_bf16, raise_bf16 = poker_forward(
        packed_bf16, x_player_game, x_acted_history, x_to_act_history)
    jax.block_until_ready((logits_bf16, raise_bf16))
    assert logits_bf16.shape == (B, 3) and raise_bf16.shape == (B,)
    assert jnp.allclose(logits_bf16, ref_logits, atol=0.15, rtol=0.15)
    assert jnp.allclose(raise_bf16, ref_raise, atol=0.15, rtol=0.15)

    print("KERNEL_OK")
</pallas_src>

<mosaic_0001>
module attributes {stable_mosaic.version = 11 : i64} {
  func.func @_poker_kernel(%arg0: i32, %arg1: memref<16x128xf32, #tpu.memory_space<vmem>>, %arg2: memref<3x16x128xf32, #tpu.memory_space<vmem>>, %arg3: memref<8x128xf32, #tpu.memory_space<vmem>>, %arg4: memref<4x128x128xf32, #tpu.memory_space<vmem>>, %arg5: memref<4x1x128xf32, #tpu.memory_space<vmem>>, %arg6: memref<5x128x128xf32, #tpu.memory_space<vmem>>, %arg7: memref<5x1x128xf32, #tpu.memory_space<vmem>>, %arg8: memref<4x128x128xf32, #tpu.memory_space<vmem>>, %arg9: memref<4x1x128xf32, #tpu.memory_space<vmem>>, %arg10: memref<16x128xf32, #tpu.memory_space<vmem>>) attributes {dimension_semantics = [#tpu.dimension_semantics<parallel>], iteration_bounds = array<i64: 1>, scalar_prefetch = 0 : i64, scratch_operands = 0 : i64, tpu.core_type = #tpu.core_type<tc>, window_params = [{transform_indices = @transform_0, window_bounds = array<i64: 16, 128>}, {transform_indices = @transform_1, window_bounds = array<i64: 3, 16, 128>}, {pipeline_mode = #tpu.pipeline_mode<synchronous>, transform_indices = @transform_2, window_bounds = array<i64: 8, 128>}, {pipeline_mode = #tpu.pipeline_mode<synchronous>, transform_indices = @transform_3, window_bounds = array<i64: 4, 128, 128>}, {pipeline_mode = #tpu.pipeline_mode<synchronous>, transform_indices = @transform_4, window_bounds = array<i64: 4, 1, 128>}, {pipeline_mode = #tpu.pipeline_mode<synchronous>, transform_indices = @transform_5, window_bounds = array<i64: 5, 128, 128>}, {pipeline_mode = #tpu.pipeline_mode<synchronous>, transform_indices = @transform_6, window_bounds = array<i64: 5, 1, 128>}, {pipeline_mode = #tpu.pipeline_mode<synchronous>, transform_indices = @transform_7, window_bounds = array<i64: 4, 128, 128>}, {pipeline_mode = #tpu.pipeline_mode<synchronous>, transform_indices = @transform_8, window_bounds = array<i64: 4, 1, 128>}, {transform_indices = @transform_9, window_bounds = array<i64: 16, 128>}]} {
    %c0 = arith.constant 0 : index
    %c0_0 = arith.constant 0 : index
    %0 = vector.load %arg1[%c0, %c0_0] : memref<16x128xf32, #tpu.memory_space<vmem>>, vector<16x128xf32>
    %c0_1 = arith.constant 0 : index
    %c0_2 = arith.constant 0 : index
    %c0_3 = arith.constant 0 : index
    %1 = vector.load %arg4[%c0_1, %c0_2, %c0_3] : memref<4x128x128xf32, #tpu.memory_space<vmem>>, vector<1x128x128xf32>
    %2 = vector.shape_cast %1 : vector<1x128x128xf32> to vector<128x128xf32>
    %cst = arith.constant dense<0.000000e+00> : vector<16x128xf32>
    %3 = tpu.matmul %0, %2, %cst {dimension_numbers = #tpu.dot_dimension_numbers<[1], [0], [0], [1], [0, 0, 1, 1], [], []>} : vector<16x128xf32>, vector<128x128xf32>, vector<16x128xf32> -> vector<16x128xf32>
    %c0_4 = arith.constant 0 : index
    %c0_5 = arith.constant 0 : index
    %c0_6 = arith.constant 0 : index
    %4 = vector.load %arg5[%c0_4, %c0_5, %c0_6] : memref<4x1x128xf32, #tpu.memory_space<vmem>>, vector<1x1x128xf32>
    %5 = vector.shape_cast %4 : vector<1x1x128xf32> to vector<1x128xf32>
    %6 = vector.broadcast %5 : vector<1x128xf32> to vector<16x128xf32>
    %7 = arith.addf %3, %6 : vector<16x128xf32>
    %cst_7 = arith.constant 0.000000e+00 : f32
    %8 = vector.broadcast %cst_7 : f32 to vector<16x128xf32>
    %9 = arith.maximumf %7, %8 : vector<16x128xf32>
    %c1 = arith.constant 1 : index
    %c0_8 = arith.constant 0 : index
    %c0_9 = arith.constant 0 : index
    %10 = vector.load %arg4[%c1, %c0_8, %c0_9] : memref<4x128x128xf32, #tpu.memory_space<vmem>>, vector<1x128x128xf32>
    %11 = vector.shape_cast %10 : vector<1x128x128xf32> to vector<128x128xf32>
    %cst_10 = arith.constant dense<0.000000e+00> : vector<16x128xf32>
    %12 = tpu.matmul %9, %11, %cst_10 {dimension_numbers = #tpu.dot_dimension_numbers<[1], [0], [0], [1], [0, 0, 1, 1], [], []>} : vector<16x128xf32>, vector<128x128xf32>, vector<16x128xf32> -> vector<16x128xf32>
    %c1_11 = arith.constant 1 : index
    %c0_12 = arith.constant 0 : index
    %c0_13 = arith.constant 0 : index
    %13 = vector.load %arg5[%c1_11, %c0_12, %c0_13] : memref<4x1x128xf32, #tpu.memory_space<vmem>>, vector<1x1x128xf32>
    %14 = vector.shape_cast %13 : vector<1x1x128xf32> to vector<1x128xf32>
    %15 = vector.broadcast %14 : vector<1x128xf32> to vector<16x128xf32>
    %16 = arith.addf %12, %15 : vector<16x128xf32>
    %cst_14 = arith.constant 0.000000e+00 : f32
    %17 = vector.broadcast %cst_14 : f32 to vector<16x128xf32>
    %18 = arith.maximumf %16, %17 : vector<16x128xf32>
    %c2 = arith.constant 2 : index
    %c0_15 = arith.constant 0 : index
    %c0_16 = arith.constant 0 : index
    %19 = vector.load %arg4[%c2, %c0_15, %c0_16] : memref<4x128x128xf32, #tpu.memory_space<vmem>>, vector<1x128x128xf32>
    %20 = vector.shape_cast %19 : vector<1x128x128xf32> to vector<128x128xf32>
    %cst_17 = arith.constant dense<0.000000e+00> : vector<16x128xf32>
    %21 = tpu.matmul %18, %20, %cst_17 {dimension_numbers = #tpu.dot_dimension_numbers<[1], [0], [0], [1], [0, 0, 1, 1], [], []>} : vector<16x128xf32>, vector<128x128xf32>, vector<16x128xf32> -> vector<16x128xf32>
    %c2_18 = arith.constant 2 : index
    %c0_19 = arith.constant 0 : index
    %c0_20 = arith.constant 0 : index
    %22 = vector.load %arg5[%c2_18, %c0_19, %c0_20] : memref<4x1x128xf32, #tpu.memory_space<vmem>>, vector<1x1x128xf32>
    %23 = vector.shape_cast %22 : vector<1x1x128xf32> to vector<1x128xf32>
    %24 = vector.broadcast %23 : vector<1x128xf32> to vector<16x128xf32>
    %25 = arith.addf %21, %24 : vector<16x128xf32>
    %cst_21 = arith.constant 0.000000e+00 : f32
    %26 = vector.broadcast %cst_21 : f32 to vector<16x128xf32>
    %27 = arith.maximumf %25, %26 : vector<16x128xf32>
    %c3 = arith.constant 3 : index
    %c0_22 = arith.constant 0 : index
    %c0_23 = arith.constant 0 : index
    %28 = vector.load %arg4[%c3, %c0_22, %c0_23] : memref<4x128x128xf32, #tpu.memory_space<vmem>>, vector<1x128x128xf32>
    %29 = vector.shape_cast %28 : vector<1x128x128xf32> to vector<128x128xf32>
    %cst_24 = arith.constant dense<0.000000e+00> : vector<16x128xf32>
    %30 = tpu.matmul %27, %29, %cst_24 {dimension_numbers = #tpu.dot_dimension_numbers<[1], [0], [0], [1], [0, 0, 1, 1], [], []>} : vector<16x128xf32>, vector<128x128xf32>, vector<16x128xf32> -> vector<16x128xf32>
    %c3_25 = arith.constant 3 : index
    %c0_26 = arith.constant 0 : index
    %c0_27 = arith.constant 0 : index
    %31 = vector.load %arg5[%c3_25, %c0_26, %c0_27] : memref<4x1x128xf32, #tpu.memory_space<vmem>>, vector<1x1x128xf32>
    %32 = vector.shape_cast %31 : vector<1x1x128xf32> to vector<1x128xf32>
    %33 = vector.broadcast %32 : vector<1x128xf32> to vector<16x128xf32>
    %34 = arith.addf %30, %33 : vector<16x128xf32>
    %c0_28 = arith.constant 0 : index
    %c0_29 = arith.constant 0 : index
    %c0_30 = arith.constant 0 : index
    %35 = vector.load %arg2[%c0_28, %c0_29, %c0_30] : memref<3x16x128xf32, #tpu.memory_space<vmem>>, vector<3x16x128xf32>
    %36 = vector.shape_cast %35 : vector<3x16x128xf32> to vector<48x128xf32>
    %c0_31 = arith.constant 0 : index
    %c0_32 = arith.constant 0 : index
    %c0_33 = arith.constant 0 : index
    %37 = vector.load %arg6[%c0_31, %c0_32, %c0_33] : memref<5x128x128xf32, #tpu.memory_space<vmem>>, vector<1x128x128xf32>
    %38 = vector.shape_cast %37 : vector<1x128x128xf32> to vector<128x128xf32>
    %cst_34 = arith.constant dense<0.000000e+00> : vector<48x128xf32>
    %39 = tpu.matmul %36, %38, %cst_34 {dimension_numbers = #tpu.dot_dimension_numbers<[1], [0], [0], [1], [0, 0, 1, 1], [], []>} : vector<48x128xf32>, vector<128x128xf32>, vector<48x128xf32> -> vector<48x128xf32>
    %c0_35 = arith.constant 0 : index
    %c0_36 = arith.constant 0 : index
    %c0_37 = arith.constant 0 : index
    %40 = vector.load %arg7[%c0_35, %c0_36, %c0_37] : memref<5x1x128xf32, #tpu.memory_space<vmem>>, vector<1x1x128xf32>
    %41 = vector.shape_cast %40 : vector<1x1x128xf32> to vector<1x128xf32>
    %42 = vector.broadcast %41 : vector<1x128xf32> to vector<48x128xf32>
    %43 = arith.addf %39, %42 : vector<48x128xf32>
    %cst_38 = arith.constant 0.000000e+00 : f32
    %44 = vector.broadcast %cst_38 : f32 to vector<48x128xf32>
    %45 = arith.maximumf %43, %44 : vector<48x128xf32>
    %c1_39 = arith.constant 1 : index
    %c0_40 = arith.constant 0 : index
    %c0_41 = arith.constant 0 : index
    %46 = vector.load %arg6[%c1_39, %c0_40, %c0_41] : memref<5x128x128xf32, #tpu.memory_space<vmem>>, vector<1x128x128xf32>
    %47 = vector.shape_cast %46 : vector<1x128x128xf32> to vector<128x128xf32>
    %cst_42 = arith.constant dense<0.000000e+00> : vector<48x128xf32>
    %48 = tpu.matmul %45, %47, %cst_42 {dimension_numbers = #tpu.dot_dimension_numbers<[1], [0], [0], [1], [0, 0, 1, 1], [], []>} : vector<48x128xf32>, vector<128x128xf32>, vector<48x128xf32> -> vector<48x128xf32>
    %c1_43 = arith.constant 1 : index
    %c0_44 = arith.constant 0 : index
    %c0_45 = arith.constant 0 : index
    %49 = vector.load %arg7[%c1_43, %c0_44, %c0_45] : memref<5x1x128xf32, #tpu.memory_space<vmem>>, vector<1x1x128xf32>
    %50 = vector.shape_cast %49 : vector<1x1x128xf32> to vector<1x128xf32>
    %51 = vector.broadcast %50 : vector<1x128xf32> to vector<48x128xf32>
    %52 = arith.addf %48, %51 : vector<48x128xf32>
    %cst_46 = arith.constant 0.000000e+00 : f32
    %53 = vector.broadcast %cst_46 : f32 to vector<48x128xf32>
    %54 = arith.maximumf %52, %53 : vector<48x128xf32>
    %c2_47 = arith.constant 2 : index
    %c0_48 = arith.constant 0 : index
    %c0_49 = arith.constant 0 : index
    %55 = vector.load %arg6[%c2_47, %c0_48, %c0_49] : memref<5x128x128xf32, #tpu.memory_space<vmem>>, vector<1x128x128xf32>
    %56 = vector.shape_cast %55 : vector<1x128x128xf32> to vector<128x128xf32>
    %cst_50 = arith.constant dense<0.000000e+00> : vector<48x128xf32>
    %57 = tpu.matmul %54, %56, %cst_50 {dimension_numbers = #tpu.dot_dimension_numbers<[1], [0], [0], [1], [0, 0, 1, 1], [], []>} : vector<48x128xf32>, vector<128x128xf32>, vector<48x128xf32> -> vector<48x128xf32>
    %c2_51 = arith.constant 2 : index
    %c0_52 = arith.constant 0 : index
    %c0_53 = arith.constant 0 : index
    %58 = vector.load %arg7[%c2_51, %c0_52, %c0_53] : memref<5x1x128xf32, #tpu.memory_space<vmem>>, vector<1x1x128xf32>
    %59 = vector.shape_cast %58 : vector<1x1x128xf32> to vector<1x128xf32>
    %60 = vector.broadcast %59 : vector<1x128xf32> to vector<48x128xf32>
    %61 = arith.addf %57, %60 : vector<48x128xf32>
    %cst_54 = arith.constant 0.000000e+00 : f32
    %62 = vector.broadcast %cst_54 : f32 to vector<48x128xf32>
    %63 = arith.maximumf %61, %62 : vector<48x128xf32>
    %c3_55 = arith.constant 3 : index
    %c0_56 = arith.constant 0 : index
    %c0_57 = arith.constant 0 : index
    %64 = vector.load %arg6[%c3_55, %c0_56, %c0_57] : memref<5x128x128xf32, #tpu.memory_space<vmem>>, vector<1x128x128xf32>
    %65 = vector.shape_cast %64 : vector<1x128x128xf32> to vector<128x128xf32>
    %cst_58 = arith.constant dense<0.000000e+00> : vector<48x128xf32>
    %66 = tpu.matmul %63, %65, %cst_58 {dimension_numbers = #tpu.dot_dimension_numbers<[1], [0], [0], [1], [0, 0, 1, 1], [], []>} : vector<48x128xf32>, vector<128x128xf32>, vector<48x128xf32> -> vector<48x128xf32>
    %c3_59 = arith.constant 3 : index
    %c0_60 = arith.constant 0 : index
    %c0_61 = arith.constant 0 : index
    %67 = vector.load %arg7[%c3_59, %c0_60, %c0_61] : memref<5x1x128xf32, #tpu.memory_space<vmem>>, vector<1x1x128xf32>
    %68 = vector.shape_cast %67 : vector<1x1x128xf32> to vector<1x128xf32>
    %69 = vector.broadcast %68 : vector<1x128xf32> to vector<48x128xf32>
    %70 = arith.addf %66, %69 : vector<48x128xf32>
    %cst_62 = arith.constant 0.000000e+00 : f32
    %71 = vector.broadcast %cst_62 : f32 to vector<48x128xf32>
    %72 = arith.maximumf %70, %71 : vector<48x128xf32>
    %c4 = arith.constant 4 : index
    %c0_63 = arith.constant 0 : index
    %c0_64 = arith.constant 0 : index
    %73 = vector.load %arg6[%c4, %c0_63, %c0_64] : memref<5x128x128xf32, #tpu.memory_space<vmem>>, vector<1x128x128xf32>
    %74 = vector.shape_cast %73 : vector<1x128x128xf32> to vector<128x128xf32>
    %cst_65 = arith.constant dense<0.000000e+00> : vector<48x128xf32>
    %75 = tpu.matmul %72, %74, %cst_65 {dimension_numbers = #tpu.dot_dimension_numbers<[1], [0], [0], [1], [0, 0, 1, 1], [], []>} : vector<48x128xf32>, vector<128x128xf32>, vector<48x128xf32> -> vector<48x128xf32>
    %c4_66 = arith.constant 4 : index
    %c0_67 = arith.constant 0 : index
    %c0_68 = arith.constant 0 : index
    %76 = vector.load %arg7[%c4_66, %c0_67, %c0_68] : memref<5x1x128xf32, #tpu.memory_space<vmem>>, vector<1x1x128xf32>
    %77 = vector.shape_cast %76 : vector<1x1x128xf32> to vector<1x128xf32>
    %78 = vector.broadcast %77 : vector<1x128xf32> to vector<48x128xf32>
    %79 = arith.addf %75, %78 : vector<48x128xf32>
    %80 = vector.shape_cast %79 : vector<48x128xf32> to vector<3x16x128xf32>
    %cst_69 = arith.constant dense<0.000000e+00> : vector<16x128xf32>
    %81 = vector.multi_reduction <add>, %80, %cst_69 [0] : vector<3x16x128xf32> to vector<16x128xf32>
    %82 = vector.extract_strided_slice %0 {offsets = [0, 0], sizes = [16, 1], strides = [1, 1]} : vector<16x128xf32> to vector<16x1xf32>
    %83 = arith.fptosi %82 : vector<16x1xf32> to vector<16x1xi32>
    %c0_i32 = arith.constant 0 : i32
    %84 = vector.broadcast %c0_i32 : i32 to vector<16x1xi32>
    %85 = arith.cmpi eq, %83, %84 : vector<16x1xi32>
    %c0_70 = arith.constant 0 : index
    %c0_71 = arith.constant 0 : index
    %86 = vector.load %arg3[%c0_70, %c0_71] : memref<8x128xf32, #tpu.memory_space<vmem>>, vector<1x128xf32>
    %c1_i32 = arith.constant 1 : i32
    %87 = vector.broadcast %c1_i32 : i32 to vector<16x1xi32>
    %88 = arith.cmpi eq, %83, %87 : vector<16x1xi32>
    %c1_72 = arith.constant 1 : index
    %c0_73 = arith.constant 0 : index
    %89 = vector.load %arg3[%c1_72, %c0_73] : memref<8x128xf32, #tpu.memory_space<vmem>>, vector<1x128xf32>
    %c2_i32 = arith.constant 2 : i32
    %90 = vector.broadcast %c2_i32 : i32 to vector<16x1xi32>
    %91 = arith.cmpi eq, %83, %90 : vector<16x1xi32>
    %c2_74 = arith.constant 2 : index
    %c0_75 = arith.constant 0 : index
    %92 = vector.load %arg3[%c2_74, %c0_75] : memref<8x128xf32, #tpu.memory_space<vmem>>, vector<1x128xf32>
    %c3_76 = arith.constant 3 : index
    %c0_77 = arith.constant 0 : index
    %93 = vector.load %arg3[%c3_76, %c0_77] : memref<8x128xf32, #tpu.memory_space<vmem>>, vector<1x128xf32>
    %94 = vector.shape_cast %91 : vector<16x1xi1> to vector<16x1xi1>
    %95 = vector.broadcast %94 : vector<16x1xi1> to vector<16x128xi1>
    %96 = vector.shape_cast %92 : vector<1x128xf32> to vector<1x128xf32>
    %97 = vector.broadcast %96 : vector<1x128xf32> to vector<16x128xf32>
    %98 = vector.shape_cast %93 : vector<1x128xf32> to vector<1x128xf32>
    %99 = vector.broadcast %98 : vector<1x128xf32> to vector<16x128xf32>
    %100 = arith.select %95, %97, %99 : vector<16x128xi1>, vector<16x128xf32>
    %101 = vector.shape_cast %88 : vector<16x1xi1> to vector<16x1xi1>
    %102 = vector.broadcast %101 : vector<16x1xi1> to vector<16x128xi1>
    %103 = vector.shape_cast %89 : vector<1x128xf32> to vector<1x128xf32>
    %104 = vector.broadcast %103 : vector<1x128xf32> to vector<16x128xf32>
    %105 = arith.select %102, %104, %100 : vector<16x128xi1>, vector<16x128xf32>
    %106 = vector.shape_cast %85 : vector<16x1xi1> to vector<16x1xi1>
    %107 = vector.broadcast %106 : vector<16x1xi1> to vector<16x128xi1>
    %108 = vector.shape_cast %86 : vector<1x128xf32> to vector<1x128xf32>
    %109 = vector.broadcast %108 : vector<1x128xf32> to vector<16x128xf32>
    %110 = arith.select %107, %109, %105 : vector<16x128xi1>, vector<16x128xf32>
    %111 = arith.addf %34, %81 : vector<16x128xf32>
    %112 = arith.addf %111, %110 : vector<16x128xf32>
    %cst_78 = arith.constant 0.000000e+00 : f32
    %113 = vector.broadcast %cst_78 : f32 to vector<16x128xf32>
    %114 = arith.maximumf %112, %113 : vector<16x128xf32>
    %c0_79 = arith.constant 0 : index
    %c0_80 = arith.constant 0 : index
    %c0_81 = arith.constant 0 : index
    %115 = vector.load %arg8[%c0_79, %c0_80, %c0_81] : memref<4x128x128xf32, #tpu.memory_space<vmem>>, vector<1x128x128xf32>
    %116 = vector.shape_cast %115 : vector<1x128x128xf32> to vector<128x128xf32>
    %cst_82 = arith.constant dense<0.000000e+00> : vector<16x128xf32>
    %117 = tpu.matmul %114, %116, %cst_82 {dimension_numbers = #tpu.dot_dimension_numbers<[1], [0], [0], [1], [0, 0, 1, 1], [], []>} : vector<16x128xf32>, vector<128x128xf32>, vector<16x128xf32> -> vector<16x128xf32>
    %c0_83 = arith.constant 0 : index
    %c0_84 = arith.constant 0 : index
    %c0_85 = arith.constant 0 : index
    %118 = vector.load %arg9[%c0_83, %c0_84, %c0_85] : memref<4x1x128xf32, #tpu.memory_space<vmem>>, vector<1x1x128xf32>
    %119 = vector.shape_cast %118 : vector<1x1x128xf32> to vector<1x128xf32>
    %120 = vector.broadcast %119 : vector<1x128xf32> to vector<16x128xf32>
    %121 = arith.addf %117, %120 : vector<16x128xf32>
    %cst_86 = arith.constant 0.000000e+00 : f32
    %122 = vector.broadcast %cst_86 : f32 to vector<16x128xf32>
    %123 = arith.maximumf %121, %122 : vector<16x128xf32>
    %c1_87 = arith.constant 1 : index
    %c0_88 = arith.constant 0 : index
    %c0_89 = arith.constant 0 : index
    %124 = vector.load %arg8[%c1_87, %c0_88, %c0_89] : memref<4x128x128xf32, #tpu.memory_space<vmem>>, vector<1x128x128xf32>
    %125 = vector.shape_cast %124 : vector<1x128x128xf32> to vector<128x128xf32>
    %cst_90 = arith.constant dense<0.000000e+00> : vector<16x128xf32>
    %126 = tpu.matmul %123, %125, %cst_90 {dimension_numbers = #tpu.dot_dimension_numbers<[1], [0], [0], [1], [0, 0, 1, 1], [], []>} : vector<16x128xf32>, vector<128x128xf32>, vector<16x128xf32> -> vector<16x128xf32>
    %c1_91 = arith.constant 1 : index
    %c0_92 = arith.constant 0 : index
    %c0_93 = arith.constant 0 : index
    %127 = vector.load %arg9[%c1_91, %c0_92, %c0_93] : memref<4x1x128xf32, #tpu.memory_space<vmem>>, vector<1x1x128xf32>
    %128 = vector.shape_cast %127 : vector<1x1x128xf32> to vector<1x128xf32>
    %129 = vector.broadcast %128 : vector<1x128xf32> to vector<16x128xf32>
    %130 = arith.addf %126, %129 : vector<16x128xf32>
    %cst_94 = arith.constant 0.000000e+00 : f32
    %131 = vector.broadcast %cst_94 : f32 to vector<16x128xf32>
    %132 = arith.maximumf %130, %131 : vector<16x128xf32>
    %c2_95 = arith.constant 2 : index
    %c0_96 = arith.constant 0 : index
    %c0_97 = arith.constant 0 : index
    %133 = vector.load %arg8[%c2_95, %c0_96, %c0_97] : memref<4x128x128xf32, #tpu.memory_space<vmem>>, vector<1x128x128xf32>
    %134 = vector.shape_cast %133 : vector<1x128x128xf32> to vector<128x128xf32>
    %cst_98 = arith.constant dense<0.000000e+00> : vector<16x128xf32>
    %135 = tpu.matmul %132, %134, %cst_98 {dimension_numbers = #tpu.dot_dimension_numbers<[1], [0], [0], [1], [0, 0, 1, 1], [], []>} : vector<16x128xf32>, vector<128x128xf32>, vector<16x128xf32> -> vector<16x128xf32>
    %c2_99 = arith.constant 2 : index
    %c0_100 = arith.constant 0 : index
    %c0_101 = arith.constant 0 : index
    %136 = vector.load %arg9[%c2_99, %c0_100, %c0_101] : memref<4x1x128xf32, #tpu.memory_space<vmem>>, vector<1x1x128xf32>
    %137 = vector.shape_cast %136 : vector<1x1x128xf32> to vector<1x128xf32>
    %138 = vector.broadcast %137 : vector<1x128xf32> to vector<16x128xf32>
    %139 = arith.addf %135, %138 : vector<16x128xf32>
    %cst_102 = arith.constant 0.000000e+00 : f32
    %140 = vector.broadcast %cst_102 : f32 to vector<16x128xf32>
    %141 = arith.maximumf %139, %140 : vector<16x128xf32>
    %c3_103 = arith.constant 3 : index
    %c0_104 = arith.constant 0 : index
    %c0_105 = arith.constant 0 : index
    %142 = vector.load %arg8[%c3_103, %c0_104, %c0_105] : memref<4x128x128xf32, #tpu.memory_space<vmem>>, vector<1x128x128xf32>
    %143 = vector.shape_cast %142 : vector<1x128x128xf32> to vector<128x128xf32>
    %cst_106 = arith.constant dense<0.000000e+00> : vector<16x128xf32>
    %144 = tpu.matmul %141, %143, %cst_106 {dimension_numbers = #tpu.dot_dimension_numbers<[1], [0], [0], [1], [0, 0, 1, 1], [], []>} : vector<16x128xf32>, vector<128x128xf32>, vector<16x128xf32> -> vector<16x128xf32>
    %c3_107 = arith.constant 3 : index
    %c0_108 = arith.constant 0 : index
    %c0_109 = arith.constant 0 : index
    %145 = vector.load %arg9[%c3_107, %c0_108, %c0_109] : memref<4x1x128xf32, #tpu.memory_space<vmem>>, vector<1x1x128xf32>
    %146 = vector.shape_cast %145 : vector<1x1x128xf32> to vector<1x128xf32>
    %147 = vector.broadcast %146 : vector<1x128xf32> to vector<16x128xf32>
    %148 = arith.addf %144, %147 : vector<16x128xf32>
    %149 = vector.extract_strided_slice %0 {offsets = [0, 1], sizes = [16, 1], strides = [1, 1]} : vector<16x128xf32> to vector<16x1xf32>
    %150 = vector.extract_strided_slice %0 {offsets = [0, 2], sizes = [16, 1], strides = [1, 1]} : vector<16x128xf32> to vector<16x1xf32>
    %151 = vector.extract_strided_slice %0 {offsets = [0, 6], sizes = [16, 1], strides = [1, 1]} : vector<16x128xf32> to vector<16x1xf32>
    %152 = arith.addf %151, %150 : vector<16x1xf32>
    %153 = arith.cmpf ole, %149, %152 : vector<16x1xf32>
    %154 = tpu.iota {dimensions = array<i32: 1>} : vector<16x128xi32>
    %c2_i32_110 = arith.constant 2 : i32
    %155 = vector.broadcast %c2_i32_110 : i32 to vector<16x128xi32>
    %156 = arith.cmpi eq, %154, %155 : vector<16x128xi32>
    %157 = vector.broadcast %153 : vector<16x1xi1> to vector<16x128xi1>
    %158 = arith.andi %156, %157 : vector<16x128xi1>
    %cst_111 = arith.constant -1.000000e+10 : f32
    %159 = vector.broadcast %cst_111 : f32 to vector<16x128xf32>
    %160 = arith.select %158, %159, %148 : vector<16x128xi1>, vector<16x128xf32>
    %161 = vector.broadcast %152 : vector<16x1xf32> to vector<16x128xf32>
    %162 = arith.maximumf %160, %161 : vector<16x128xf32>
    %163 = vector.broadcast %149 : vector<16x1xf32> to vector<16x128xf32>
    %164 = arith.minimumf %162, %163 : vector<16x128xf32>
    %c3_i32 = arith.constant 3 : i32
    %165 = vector.broadcast %c3_i32 : i32 to vector<16x128xi32>
    %166 = arith.cmpi eq, %154, %165 : vector<16x128xi32>
    %167 = arith.select %166, %164, %160 : vector<16x128xi1>, vector<16x128xf32>
    %c0_112 = arith.constant 0 : index
    %c0_113 = arith.constant 0 : index
    %168 = vector.load %arg10[%c0_112, %c0_113] : memref<16x128xf32, #tpu.memory_space<vmem>>, vector<16x128xf32>
    tpu.vector_store %arg10[%c0_112, %c0_113], %167 {strides = array<i32>} : memref<16x128xf32, #tpu.memory_space<vmem>>, vector<16x128xf32>,
    return
  }
  func.func @transform_0(%arg0: i32) -> (i32, i32) {
    %c0_i32 = arith.constant 0 : i32
    %c0_i32_0 = arith.constant 0 : i32
    return %arg0, %c0_i32 : i32, i32
  }
  func.func @transform_1(%arg0: i32) -> (i32, i32, i32) {
    %c0_i32 = arith.constant 0 : i32
    %c0_i32_0 = arith.constant 0 : i32
    %c0_i32_1 = arith.constant 0 : i32
    return %c0_i32, %arg0, %c0_i32_0 : i32, i32, i32
  }
  func.func @transform_2(%arg0: i32) -> (i32, i32) {
    %c0_i32 = arith.constant 0 : i32
    %c0_i32_0 = arith.constant 0 : i32
    %c0_i32_1 = arith.constant 0 : i32
    return %c0_i32, %c0_i32_0 : i32, i32
  }
  func.func @transform_3(%arg0: i32) -> (i32, i32, i32) {
    %c0_i32 = arith.constant 0 : i32
    %c0_i32_0 = arith.constant 0 : i32
    %c0_i32_1 = arith.constant 0 : i32
    %c0_i32_2 = arith.constant 0 : i32
    return %c0_i32, %c0_i32_0, %c0_i32_1 : i32, i32, i32
  }
  func.func @transform_4(%arg0: i32) -> (i32, i32, i32) {
    %c0_i32 = arith.constant 0 : i32
    %c0_i32_0 = arith.constant 0 : i32
    %c0_i32_1 = arith.constant 0 : i32
    %c0_i32_2 = arith.constant 0 : i32
    return %c0_i32, %c0_i32_0, %c0_i32_1 : i32, i32, i32
  }
  func.func @transform_5(%arg0: i32) -> (i32, i32, i32) {
    %c0_i32 = arith.constant 0 : i32
    %c0_i32_0 = arith.constant 0 : i32
    %c0_i32_1 = arith.constant 0 : i32
    %c0_i32_2 = arith.constant 0 : i32
    return %c0_i32, %c0_i32_0, %c0_i32_1 : i32, i32, i32
  }
  func.func @transform_6(%arg0: i32) -> (i32, i32, i32) {
    %c0_i32 = arith.constant 0 : i32
    %c0_i32_0 = arith.constant 0 : i32
    %c0_i32_1 = arith.constant 0 : i32
    %c0_i32_2 = arith.constant 0 : i32
    return %c0_i32, %c0_i32_0, %c0_i32_1 : i32, i32, i32
  }
  func.func @transform_7(%arg0: i32) -> (i32, i32, i32) {
    %c0_i32 = arith.constant 0 : i32
    %c0_i32_0 = arith.constant 0 : i32
    %c0_i32_1 = arith.constant 0 : i32
    %c0_i32_2 = arith.constant 0 : i32
    return %c0_i32, %c0_i32_0, %c0_i32_1 : i32, i32, i32
  }
  func.func @transform_8(%arg0: i32) -> (i32, i32, i32) {
    %c0_i32 = arith.constant 0 : i32
    %c0_i32_0 = arith.constant 0 : i32
    %c0_i32_1 = arith.constant 0 : i32
    %c0_i32_2 = arith.constant 0 : i32
    return %c0_i32, %c0_i32_0, %c0_i32_1 : i32, i32, i32
  }
  func.func @transform_9(%arg0: i32) -> (i32, i32) {
    %c0_i32 = arith.constant 0 : i32
    %c0_i32_0 = arith.constant 0 : i32
    return %arg0, %c0_i32 : i32, i32
  }
}

</mosaic_0001>

<llo_original>
// kernel: poker_forward.1
$region0: #{poker_forward.1}
  #allocation0 [shape = 'u32[]', space=smem, size = 0x4, offset = 0x4, fixed_abs, tag = 'smem constant byte address 0x4 - core index']
  #allocation1 [shape = 'u32[72,128]{1,0:T(1,128)}', space=vmem, size = 0x9000, scoped, tag = 'internal scratch']
  %s0 = inlined_call_operand.vmem [shape: f32[16,128], index: 0, kind: input, shape index: {}]
  %s1 = inlined_call_operand.vmem [shape: f32[3,16,128], index: 1, kind: input, shape index: {}]
  %s2 = inlined_call_operand.vmem [shape: f32[8,128], index: 2, kind: input, shape index: {}]
  %s3 = inlined_call_operand.vmem [shape: f32[4,128,128], index: 3, kind: input, shape index: {}]
  %s4 = inlined_call_operand.vmem [shape: f32[4,1,128], index: 4, kind: input, shape index: {}]
  %s5 = inlined_call_operand.vmem [shape: f32[5,128,128], index: 5, kind: input, shape index: {}]
  %s6 = inlined_call_operand.vmem [shape: f32[5,1,128], index: 6, kind: input, shape index: {}]
  %s7 = inlined_call_operand.hbm [shape: f32[4,128,128], index: 7, kind: input, shape index: {}]
  %s8 = inlined_call_operand.vmem [shape: f32[4,1,128], index: 8, kind: input, shape index: {}]
  %s9 = inlined_call_operand.vmem [shape: f32[16,128], index: 9, kind: output, shape index: {}]
  %s10 = sld [smem:[#allocation0]]
  $region50: #{poker_forward.1} parent=0
    _
  %s12 = ssub.s32 1, %s10
  %s13 = scalar_select 0, %s12, %s10
  $region1: #{poker_forward.1} parent=0
    #allocation2 [shape = 'u8[262144]{0}', space=vmem, size = 0x40000, scoped, tag = 'input window, operand 7, single buffered']
    #allocation3 [shape = 's32[1]{0}', space=sflag, size = 0x4, scoped, tag = 'scoped memory for poker_forward.1']
    %14 = vsyncpa [#allocation3], 0
    // Predicated region
    $region2: #{poker_forward.1} parent=1 // pred_check
      _
    $region3: #{poker_forward.1} parent=1 // pred_check_branch
      %16 = sbr.rel (0) target = $region5
    $region4: #{poker_forward.1} parent=1 // pred_region
      _
    $region5: #{poker_forward.1} parent=1 // pred_fallthru
      _
    // Predicated region
    $region6: #{poker_forward.1} parent=1 // pred_check
      _
    $region7: #{poker_forward.1} parent=1 // pred_check_branch
      %18 = sbr.rel (0) target = $region9
    $region8: #{poker_forward.1} parent=1 // pred_region
      _
    $region9: #{poker_forward.1} parent=1 // pred_fallthru
      _
    // Predicated region
    $region10: #{poker_forward.1} parent=1 // pred_check
      _
    $region11: #{poker_forward.1} parent=1 // pred_check_branch
      %20 = sbr.rel (0) target = $region13
    $region12: #{poker_forward.1} parent=1 // pred_region
      _
    $region13: #{poker_forward.1} parent=1 // pred_fallthru
      _
    // Predicated region
    $region14: #{poker_forward.1} parent=1 // pred_check
      _
    $region15: #{poker_forward.1} parent=1 // pred_check_branch
      %22 = sbr.rel (0) target = $region17
    $region16: #{poker_forward.1} parent=1 // pred_region
      _
    $region17: #{poker_forward.1} parent=1 // pred_fallthru
      _
    // Predicated region
    $region18: #{poker_forward.1} parent=1 // pred_check
      _
    $region19: #{poker_forward.1} parent=1 // pred_check_branch
      %24 = sbr.rel (0) target = $region21
    $region20: #{poker_forward.1} parent=1 // pred_region
      _
    $region21: #{poker_forward.1} parent=1 // pred_fallthru
      _
    // Predicated region
    $region22: #{poker_forward.1} parent=1 // pred_check
      _
    $region23: #{poker_forward.1} parent=1 // pred_check_branch
      %26 = sbr.rel (0) target = $region25
    $region24: #{poker_forward.1} parent=1 // pred_region
      _
    $region25: #{poker_forward.1} parent=1 // pred_fallthru
      _
    // Predicated region
    $region26: #{poker_forward.1} parent=1 // pred_check
      _
    $region27: #{poker_forward.1} parent=1 // pred_check_branch
      %28 = sbr.rel (0) target = $region29
    $region28: #{poker_forward.1} parent=1 // pred_region
      _
    $region29: #{poker_forward.1} parent=1 // pred_fallthru
      _
    // Predicated region
    $region30: #{poker_forward.1} parent=1 // pred_check
      _
    $region31: #{poker_forward.1} parent=1 // pred_check_branch
      %30 = sbr.rel (0) target = $region33
    $region32: #{poker_forward.1} parent=1 // pred_region
      %32 = vsyncadd [#allocation3], 0
      %s33 = sshll.u32 %s7, 4
      %s34 = int_to_ptr.hbm [resolvable:$true] %s33
      %s35 = sshll.u32 [#allocation2], 4
      %s36 = int_to_ptr.vmem [resolvable:$true] %s35
      %41 = dma.hbm_to_vmem [thread:$0]  %s34, 8192, %s36, [#allocation3], 128, 128, 8
    $region33: #{poker_forward.1} parent=1 // pred_fallthru
      _
    // Predicated region
    $region34: #{poker_forward.1} parent=1 // pred_check
      _
    $region35: #{poker_forward.1} parent=1 // pred_check_branch
      %43 = sbr.rel (0) target = $region37
    $region36: #{poker_forward.1} parent=1 // pred_region
      _
    $region37: #{poker_forward.1} parent=1 // pred_fallthru
      _
    // Predicated region
    $region38: #{poker_forward.1} parent=1 // pred_check
      _
    $region39: #{poker_forward.1} parent=1 // pred_check_branch
      %45 = sbr.rel (0) target = $region41
    $region40: #{poker_forward.1} parent=1 // pred_region
      %47 = dma.done [#allocation3], 8192
    $region41: #{poker_forward.1} parent=1 // pred_fallthru
      _
    %v48 = vld [vmem:[%s0] sm:$0xff]
    %v49 = vld [vmem:[%s0 + $0x8] sm:$0xff]
    %v50 = vld [vmem:[%s3] sm:$0xff]
    %v51 = vld [vmem:[%s3 + $0x8] sm:$0xff]
    %v52 = vld [vmem:[%s3 + $0x10] sm:$0xff]
    %v53 = vld [vmem:[%s3 + $0x18] sm:$0xff]
    %v54 = vld [vmem:[%s3 + $0x20] sm:$0xff]
    %v55 = vld [vmem:[%s3 + $0x28] sm:$0xff]
    %v56 = vld [vmem:[%s3 + $0x30] sm:$0xff]
    %v57 = vld [vmem:[%s3 + $0x38] sm:$0xff]
    %v58 = vld [vmem:[%s3 + $0x40] sm:$0xff]
    %v59 = vld [vmem:[%s3 + $0x48] sm:$0xff]
    %v60 = vld [vmem:[%s3 + $0x50] sm:$0xff]
    %v61 = vld [vmem:[%s3 + $0x58] sm:$0xff]
    %v62 = vld [vmem:[%s3 + $0x60] sm:$0xff]
    %v63 = vld [vmem:[%s3 + $0x68] sm:$0xff]
    %v64 = vld [vmem:[%s3 + $0x70] sm:$0xff]
    %v65 = vld [vmem:[%s3 + $0x78] sm:$0xff]
    %v66 = vld [vmem:[%s4] sm:$0x1]
    %v68 = vperm.slane %v66, 0
    %70 = vmatpush.msra.mxu0 %v65
    %71 = vmatpush.msra.mxu0 %v64
    %72 = vmatpush.msra.mxu0 %v63
    %73 = vmatpush.msra.mxu0 %v62
    %74 = vmatpush.msra.mxu0 %v61
    %75 = vmatpush.msra.mxu0 %v60
    %76 = vmatpush.msra.mxu0 %v59
    %77 = vmatpush.msra.mxu0 %v58
    %78 = vmatpush.msra.mxu0 %v57
    %79 = vmatpush.msra.mxu0 %v56
    %80 = vmatpush.msra.mxu0 %v55
    %81 = vmatpush.msra.mxu0 %v54
    %82 = vmatpush.msra.mxu0 %v53
    %83 = vmatpush.msra.mxu0 %v52
    %84 = vmatpush.msra.mxu0 %v51
    %85 = vmatpush.msra.mxu0 %v50
    %86 = vmatmul.f32.gmra.mxu0 %v48
    %v87 = vpop.f32.mrf.mxu0
    %v88 = vadd.f32 %v68, %v87
    %89 = vmatmul.f32.gmra.mxu0 %v49
    %v90 = vpop.f32.mrf.mxu0
    %v91 = vadd.f32 %v68, %v90
    %92 = vdwg.mxu0
    %v93 = vmax.f32 %v88, 0.0
    %v94 = vmax.f32 %v91, 0.0
    %s95 = scalar_lea.vmem %s3, 128
    %v96 = vld [vmem:[%s95] sm:$0xff]
    %v97 = vld [vmem:[%s95 + $0x8] sm:$0xff]
    %v98 = vld [vmem:[%s95 + $0x10] sm:$0xff]
    %v99 = vld [vmem:[%s95 + $0x18] sm:$0xff]
    %v100 = vld [vmem:[%s95 + $0x20] sm:$0xff]
    %v101 = vld [vmem:[%s95 + $0x28] sm:$0xff]
    %v102 = vld [vmem:[%s95 + $0x30] sm:$0xff]
    %v103 = vld [vmem:[%s95 + $0x38] sm:$0xff]
    %v104 = vld [vmem:[%s95 + $0x40] sm:$0xff]
    %v105 = vld [vmem:[%s95 + $0x48] sm:$0xff]
    %v106 = vld [vmem:[%s95 + $0x50] sm:$0xff]
    %v107 = vld [vmem:[%s95 + $0x58] sm:$0xff]
    %v108 = vld [vmem:[%s95 + $0x60] sm:$0xff]
    %v109 = vld [vmem:[%s95 + $0x68] sm:$0xff]
    %v110 = vld [vmem:[%s95 + $0x70] sm:$0xff]
    %v111 = vld [vmem:[%s95 + $0x78] sm:$0xff]
    %s112 = scalar_lea.vmem %s4, 1
    %v113 = vld [vmem:[%s112] sm:$0x1]
    %v115 = vperm.slane %v113, 0
    %117 = vmatpush.msra.mxu0 %v111
    %118 = vmatpush.msra.mxu0 %v110
    %119 = vmatpush.msra.mxu0 %v109
    %120 = vmatpush.msra.mxu0 %v108
    %121 = vmatpush.msra.mxu0 %v107
    %122 = vmatpush.msra.mxu0 %v106
    %123 = vmatpush.msra.mxu0 %v105
    %124 = vmatpush.msra.mxu0 %v104
    %125 = vmatpush.msra.mxu0 %v103
    %126 = vmatpush.msra.mxu0 %v102
    %127 = vmatpush.msra.mxu0 %v101
    %128 = vmatpush.msra.mxu0 %v100
    %129 = vmatpush.msra.mxu0 %v99
    %130 = vmatpush.msra.mxu0 %v98
    %131 = vmatpush.msra.mxu0 %v97
    %132 = vmatpush.msra.mxu0 %v96
    %133 = vmatmul.f32.gmra.mxu0 %v93
    %v134 = vpop.f32.mrf.mxu0
    %v135 = vadd.f32 %v115, %v134
    %136 = vmatmul.f32.gmra.mxu0 %v94
    %v137 = vpop.f32.mrf.mxu0
    %v138 = vadd.f32 %v115, %v137
    %139 = vdwg.mxu0
    %v140 = vmax.f32 %v135, 0.0
    %v141 = vmax.f32 %v138, 0.0
    %s142 = scalar_lea.vmem %s3, 256
    %v143 = vld [vmem:[%s142] sm:$0xff]
    %v144 = vld [vmem:[%s142 + $0x8] sm:$0xff]
    %v145 = vld [vmem:[%s142 + $0x10] sm:$0xff]
    %v146 = vld [vmem:[%s142 + $0x18] sm:$0xff]
    %v147 = vld [vmem:[%s142 + $0x20] sm:$0xff]
    %v148 = vld [vmem:[%s142 + $0x28] sm:$0xff]
    %v149 = vld [vmem:[%s142 + $0x30] sm:$0xff]
    %v150 = vld [vmem:[%s142 + $0x38] sm:$0xff]
    %v151 = vld [vmem:[%s142 + $0x40] sm:$0xff]
    %v152 = vld [vmem:[%s142 + $0x48] sm:$0xff]
    %v153 = vld [vmem:[%s142 + $0x50] sm:$0xff]
    %v154 = vld [vmem:[%s142 + $0x58] sm:$0xff]
    %v155 = vld [vmem:[%s142 + $0x60] sm:$0xff]
    %v156 = vld [vmem:[%s142 + $0x68] sm:$0xff]
    %v157 = vld [vmem:[%s142 + $0x70] sm:$0xff]
    %v158 = vld [vmem:[%s142 + $0x78] sm:$0xff]
    %s159 = scalar_lea.vmem %s4, 2
    %v160 = vld [vmem:[%s159] sm:$0x1]
    %v162 = vperm.slane %v160, 0
    %164 = vmatpush.msra.mxu0 %v158
    %165 = vmatpush.msra.mxu0 %v157
    %166 = vmatpush.msra.mxu0 %v156
    %167 = vmatpush.msra.mxu0 %v155
    %168 = vmatpush.msra.mxu0 %v154
    %169 = vmatpush.msra.mxu0 %v153
    %170 = vmatpush.msra.mxu0 %v152
    %171 = vmatpush.msra.mxu0 %v151
    %172 = vmatpush.msra.mxu0 %v150
    %173 = vmatpush.msra.mxu0 %v149
    %174 = vmatpush.msra.mxu0 %v148
    %175 = vmatpush.msra.mxu0 %v147
    %176 = vmatpush.msra.mxu0 %v146
    %177 = vmatpush.msra.mxu0 %v145
    %178 = vmatpush.msra.mxu0 %v144
    %179 = vmatpush.msra.mxu0 %v143
    %180 = vmatmul.f32.gmra.mxu0 %v140
    %v181 = vpop.f32.mrf.mxu0
    %v182 = vadd.f32 %v162, %v181
    %183 = vmatmul.f32.gmra.mxu0 %v141
    %v184 = vpop.f32.mrf.mxu0
    %v185 = vadd.f32 %v162, %v184
    %186 = vdwg.mxu0
    %v187 = vmax.f32 %v182, 0.0
    %v188 = vmax.f32 %v185, 0.0
    %s189 = scalar_lea.vmem %s3, 384
    %v190 = vld [vmem:[%s189] sm:$0xff]
    %v191 = vld [vmem:[%s189 + $0x8] sm:$0xff]
    %v192 = vld [vmem:[%s189 + $0x10] sm:$0xff]
    %v193 = vld [vmem:[%s189 + $0x18] sm:$0xff]
    %v194 = vld [vmem:[%s189 + $0x20] sm:$0xff]
    %v195 = vld [vmem:[%s189 + $0x28] sm:$0xff]
    %v196 = vld [vmem:[%s189 + $0x30] sm:$0xff]
    %v197 = vld [vmem:[%s189 + $0x38] sm:$0xff]
    %v198 = vld [vmem:[%s189 + $0x40] sm:$0xff]
    %v199 = vld [vmem:[%s189 + $0x48] sm:$0xff]
    %v200 = vld [vmem:[%s189 + $0x50] sm:$0xff]
    %v201 = vld [vmem:[%s189 + $0x58] sm:$0xff]
    %v202 = vld [vmem:[%s189 + $0x60] sm:$0xff]
    %v203 = vld [vmem:[%s189 + $0x68] sm:$0xff]
    %v204 = vld [vmem:[%s189 + $0x70] sm:$0xff]
    %v205 = vld [vmem:[%s189 + $0x78] sm:$0xff]
    %s206 = scalar_lea.vmem %s4, 3
    %v207 = vld [vmem:[%s206] sm:$0x1]
    %v209 = vperm.slane %v207, 0
    %211 = vmatpush.msra.mxu0 %v205
    %212 = vmatpush.msra.mxu0 %v204
    %213 = vmatpush.msra.mxu0 %v203
    %214 = vmatpush.msra.mxu0 %v202
    %215 = vmatpush.msra.mxu0 %v201
    %216 = vmatpush.msra.mxu0 %v200
    %217 = vmatpush.msra.mxu0 %v199
    %218 = vmatpush.msra.mxu0 %v198
    %219 = vmatpush.msra.mxu0 %v197
    %220 = vmatpush.msra.mxu0 %v196
    %221 = vmatpush.msra.mxu0 %v195
    %222 = vmatpush.msra.mxu0 %v194
    %223 = vmatpush.msra.mxu0 %v193
    %224 = vmatpush.msra.mxu0 %v192
    %225 = vmatpush.msra.mxu0 %v191
    %226 = vmatpush.msra.mxu0 %v190
    %227 = vmatmul.f32.gmra.mxu0 %v187
    %v228 = vpop.f32.mrf.mxu0
    %v229 = vadd.f32 %v209, %v228
    %230 = vmatmul.f32.gmra.mxu0 %v188
    %v231 = vpop.f32.mrf.mxu0
    %v232 = vadd.f32 %v209, %v231
    %233 = vdwg.mxu0
    %v234 = vld [vmem:[%s1] sm:$0xff]
    %v235 = vld [vmem:[%s1 + $0x8] sm:$0xff]
    %v236 = vld [vmem:[%s1 + $0x10] sm:$0xff]
    %v237 = vld [vmem:[%s1 + $0x18] sm:$0xff]
    %v238 = vld [vmem:[%s1 + $0x20] sm:$0xff]
    %v239 = vld [vmem:[%s1 + $0x28] sm:$0xff]
    %v240 = vld [vmem:[%s5] sm:$0xff]
    %v241 = vld [vmem:[%s5 + $0x8] sm:$0xff]
    %v242 = vld [vmem:[%s5 + $0x10] sm:$0xff]
    %v243 = vld [vmem:[%s5 + $0x18] sm:$0xff]
    %v244 = vld [vmem:[%s5 + $0x20] sm:$0xff]
    %v245 = vld [vmem:[%s5 + $0x28] sm:$0xff]
    %v246 = vld [vmem:[%s5 + $0x30] sm:$0xff]
    %v247 = vld [vmem:[%s5 + $0x38] sm:$0xff]
    %v248 = vld [vmem:[%s5 + $0x40] sm:$0xff]
    %v249 = vld [vmem:[%s5 + $0x48] sm:$0xff]
    %v250 = vld [vmem:[%s5 + $0x50] sm:$0xff]
    %v251 = vld [vmem:[%s5 + $0x58] sm:$0xff]
    %v252 = vld [vmem:[%s5 + $0x60] sm:$0xff]
    %v253 = vld [vmem:[%s5 + $0x68] sm:$0xff]
    %v254 = vld [vmem:[%s5 + $0x70] sm:$0xff]
    %v255 = vld [vmem:[%s5 + $0x78] sm:$0xff]
    %v256 = vld [vmem:[%s6] sm:$0x1]
    %v258 = vperm.slane %v256, 0
    %260 = vmatpush.msra.mxu0 %v255
    %261 = vmatpush.msra.mxu0 %v254
    %262 = vmatpush.msra.mxu0 %v253
    %263 = vmatpush.msra.mxu0 %v252
    %264 = vmatpush.msra.mxu0 %v251
    %265 = vmatpush.msra.mxu0 %v250
    %266 = vmatpush.msra.mxu0 %v249
    %267 = vmatpush.msra.mxu0 %v248
    %268 = vmatpush.msra.mxu0 %v247
    %269 = vmatpush.msra.mxu0 %v246
    %270 = vmatpush.msra.mxu0 %v245
    %271 = vmatpush.msra.mxu0 %v244
    %272 = vmatpush.msra.mxu0 %v243
    %273 = vmatpush.msra.mxu0 %v242
    %274 = vmatpush.msra.mxu0 %v241
    %275 = vmatpush.msra.mxu0 %v240
    %276 = vmatmul.f32.gmra.mxu0 %v234
    %v277 = vpop.f32.mrf.mxu0
    %v278 = vadd.f32 %v258, %v277
    %279 = vmatmul.f32.gmra.mxu0 %v235
    %v280 = vpop.f32.mrf.mxu0
    %v281 = vadd.f32 %v258, %v280
    %282 = vmatmul.f32.gmra.mxu0 %v236
    %v283 = vpop.f32.mrf.mxu0
    %v284 = vadd.f32 %v258, %v283
    %285 = vmatmul.f32.gmra.mxu0 %v237
    %v286 = vpop.f32.mrf.mxu0
    %v287 = vadd.f32 %v258, %v286
    %288 = vmatmul.f32.gmra.mxu0 %v238
    %v289 = vpop.f32.mrf.mxu0
    %v290 = vadd.f32 %v258, %v289
    %291 = vmatmul.f32.gmra.mxu0 %v239
    %v292 = vpop.f32.mrf.mxu0
    %v293 = vadd.f32 %v258, %v292
    %294 = vdwg.mxu0
    %v295 = vmax.f32 %v278, 0.0
    %v296 = vmax.f32 %v281, 0.0
    %v297 = vmax.f32 %v284, 0.0
    %v298 = vmax.f32 %v287, 0.0
    %v299 = vmax.f32 %v290, 0.0
    %v300 = vmax.f32 %v293, 0.0
    %s301 = scalar_lea.vmem %s5, 128
    %v302 = vld [vmem:[%s301] sm:$0xff]
    %v303 = vld [vmem:[%s301 + $0x8] sm:$0xff]
    %v304 = vld [vmem:[%s301 + $0x10] sm:$0xff]
    %v305 = vld [vmem:[%s301 + $0x18] sm:$0xff]
    %v306 = vld [vmem:[%s301 + $0x20] sm:$0xff]
    %v307 = vld [vmem:[%s301 + $0x28] sm:$0xff]
    %v308 = vld [vmem:[%s301 + $0x30] sm:$0xff]
    %v309 = vld [vmem:[%s301 + $0x38] sm:$0xff]
    %v310 = vld [vmem:[%s301 + $0x40] sm:$0xff]
    %v311 = vld [vmem:[%s301 + $0x48] sm:$0xff]
    %v312 = vld [vmem:[%s301 + $0x50] sm:$0xff]
    %v313 = vld [vmem:[%s301 + $0x58] sm:$0xff]
    %v314 = vld [vmem:[%s301 + $0x60] sm:$0xff]
    %v315 = vld [vmem:[%s301 + $0x68] sm:$0xff]
    %v316 = vld [vmem:[%s301 + $0x70] sm:$0xff]
    %v317 = vld [vmem:[%s301 + $0x78] sm:$0xff]
    %s318 = scalar_lea.vmem %s6, 1
    %v319 = vld [vmem:[%s318] sm:$0x1]
    %v321 = vperm.slane %v319, 0
    %323 = vmatpush.msra.mxu0 %v317
    %324 = vmatpush.msra.mxu0 %v316
    %325 = vmatpush.msra.mxu0 %v315
    %326 = vmatpush.msra.mxu0 %v314
    %327 = vmatpush.msra.mxu0 %v313
    %328 = vmatpush.msra.mxu0 %v312
    %329 = vmatpush.msra.mxu0 %v311
    %330 = vmatpush.msra.mxu0 %v310
    %331 = vmatpush.msra.mxu0 %v309
    %332 = vmatpush.msra.mxu0 %v308
    %333 = vmatpush.msra.mxu0 %v307
    %334 = vmatpush.msra.mxu0 %v306
    %335 = vmatpush.msra.mxu0 %v305
    %336 = vmatpush.msra.mxu0 %v304
    %337 = vmatpush.msra.mxu0 %v303
    %338 = vmatpush.msra.mxu0 %v302
    %339 = vmatmul.f32.gmra.mxu0 %v295
    %v340 = vpop.f32.mrf.mxu0
    %v341 = vadd.f32 %v321, %v340
    %342 = vmatmul.f32.gmra.mxu0 %v296
    %v343 = vpop.f32.mrf.mxu0
    %v344 = vadd.f32 %v321, %v343
    %345 = vmatmul.f32.gmra.mxu0 %v297
    %v346 = vpop.f32.mrf.mxu0
    %v347 = vadd.f32 %v321, %v346
    %348 = vmatmul.f32.gmra.mxu0 %v298
    %v349 = vpop.f32.mrf.mxu0
    %v350 = vadd.f32 %v321, %v349
    %351 = vmatmul.f32.gmra.mxu0 %v299
    %v352 = vpop.f32.mrf.mxu0
    %v353 = vadd.f32 %v321, %v352
    %354 = vmatmul.f32.gmra.mxu0 %v300
    %v355 = vpop.f32.mrf.mxu0
    %v356 = vadd.f32 %v321, %v355
    %357 = vdwg.mxu0
    %v358 = vmax.f32 %v341, 0.0
    %v359 = vmax.f32 %v344, 0.0
    %v360 = vmax.f32 %v347, 0.0
    %v361 = vmax.f32 %v350, 0.0
    %v362 = vmax.f32 %v353, 0.0
    %v363 = vmax.f32 %v356, 0.0
    %s364 = scalar_lea.vmem %s5, 256
    %v365 = vld [vmem:[%s364] sm:$0xff]
    %v366 = vld [vmem:[%s364 + $0x8] sm:$0xff]
    %v367 = vld [vmem:[%s364 + $0x10] sm:$0xff]
    %v368 = vld [vmem:[%s364 + $0x18] sm:$0xff]
    %v369 = vld [vmem:[%s364 + $0x20] sm:$0xff]
    %v370 = vld [vmem:[%s364 + $0x28] sm:$0xff]
    %v371 = vld [vmem:[%s364 + $0x30] sm:$0xff]
    %v372 = vld [vmem:[%s364 + $0x38] sm:$0xff]
    %v373 = vld [vmem:[%s364 + $0x40] sm:$0xff]
    %v374 = vld [vmem:[%s364 + $0x48] sm:$0xff]
    %v375 = vld [vmem:[%s364 + $0x50] sm:$0xff]
    %v376 = vld [vmem:[%s364 + $0x58] sm:$0xff]
    %v377 = vld [vmem:[%s364 + $0x60] sm:$0xff]
    %v378 = vld [vmem:[%s364 + $0x68] sm:$0xff]
    %v379 = vld [vmem:[%s364 + $0x70] sm:$0xff]
    %v380 = vld [vmem:[%s364 + $0x78] sm:$0xff]
    %s381 = scalar_lea.vmem %s6, 2
    %v382 = vld [vmem:[%s381] sm:$0x1]
    %v384 = vperm.slane %v382, 0
    %386 = vmatpush.msra.mxu0 %v380
    %387 = vmatpush.msra.mxu0 %v379
    %388 = vmatpush.msra.mxu0 %v378
    %389 = vmatpush.msra.mxu0 %v377
    %390 = vmatpush.msra.mxu0 %v376
    %391 = vmatpush.msra.mxu0 %v375
    %392 = vmatpush.msra.mxu0 %v374
    %393 = vmatpush.msra.mxu0 %v373
    %394 = vmatpush.msra.mxu0 %v372
    %395 = vmatpush.msra.mxu0 %v371
    %396 = vmatpush.msra.mxu0 %v370
    %397 = vmatpush.msra.mxu0 %v369
    %398 = vmatpush.msra.mxu0 %v368
    %399 = vmatpush.msra.mxu0 %v367
    %400 = vmatpush.msra.mxu0 %v366
    %401 = vmatpush.msra.mxu0 %v365
    %402 = vmatmul.f32.gmra.mxu0 %v358
    %v403 = vpop.f32.mrf.mxu0
    %v404 = vadd.f32 %v384, %v403
    %405 = vmatmul.f32.gmra.mxu0 %v359
    %v406 = vpop.f32.mrf.mxu0
    %v407 = vadd.f32 %v384, %v406
    %408 = vmatmul.f32.gmra.mxu0 %v360
    %v409 = vpop.f32.mrf.mxu0
    %v410 = vadd.f32 %v384, %v409
    %411 = vmatmul.f32.gmra.mxu0 %v361
    %v412 = vpop.f32.mrf.mxu0
    %v413 = vadd.f32 %v384, %v412
    %414 = vmatmul.f32.gmra.mxu0 %v362
    %v415 = vpop.f32.mrf.mxu0
    %v416 = vadd.f32 %v384, %v415
    %417 = vmatmul.f32.gmra.mxu0 %v363
    %v418 = vpop.f32.mrf.mxu0
    %v419 = vadd.f32 %v384, %v418
    %420 = vdwg.mxu0
    %v421 = vmax.f32 %v404, 0.0
    %v422 = vmax.f32 %v407, 0.0
    %v423 = vmax.f32 %v410, 0.0
    %v424 = vmax.f32 %v413, 0.0
    %v425 = vmax.f32 %v416, 0.0
    %v426 = vmax.f32 %v419, 0.0
    %s427 = scalar_lea.vmem %s5, 384
    %v428 = vld [vmem:[%s427] sm:$0xff]
    %v429 = vld [vmem:[%s427 + $0x8] sm:$0xff]
    %v430 = vld [vmem:[%s427 + $0x10] sm:$0xff]
    %v431 = vld [vmem:[%s427 + $0x18] sm:$0xff]
    %v432 = vld [vmem:[%s427 + $0x20] sm:$0xff]
    %v433 = vld [vmem:[%s427 + $0x28] sm:$0xff]
    %v434 = vld [vmem:[%s427 + $0x30] sm:$0xff]
    %v435 = vld [vmem:[%s427 + $0x38] sm:$0xff]
    %v436 = vld [vmem:[%s427 + $0x40] sm:$0xff]
    %v437 = vld [vmem:[%s427 + $0x48] sm:$0xff]
    %v438 = vld [vmem:[%s427 + $0x50] sm:$0xff]
    %v439 = vld [vmem:[%s427 + $0x58] sm:$0xff]
    %v440 = vld [vmem:[%s427 + $0x60] sm:$0xff]
    %v441 = vld [vmem:[%s427 + $0x68] sm:$0xff]
    %v442 = vld [vmem:[%s427 + $0x70] sm:$0xff]
    %v443 = vld [vmem:[%s427 + $0x78] sm:$0xff]
    %s444 = scalar_lea.vmem %s6, 3
    %v445 = vld [vmem:[%s444] sm:$0x1]
    %v447 = vperm.slane %v445, 0
    %449 = vmatpush.msra.mxu0 %v443
    %450 = vmatpush.msra.mxu0 %v442
    %451 = vmatpush.msra.mxu0 %v441
    %452 = vmatpush.msra.mxu0 %v440
    %453 = vmatpush.msra.mxu0 %v439
    %454 = vmatpush.msra.mxu0 %v438
    %455 = vmatpush.msra.mxu0 %v437
    %456 = vmatpush.msra.mxu0 %v436
    %457 = vmatpush.msra.mxu0 %v435
    %458 = vmatpush.msra.mxu0 %v434
    %459 = vmatpush.msra.mxu0 %v433
    %460 = vmatpush.msra.mxu0 %v432
    %461 = vmatpush.msra.mxu0 %v431
    %462 = vmatpush.msra.mxu0 %v430
    %463 = vmatpush.msra.mxu0 %v429
    %464 = vmatpush.msra.mxu0 %v428
    %465 = vmatmul.f32.gmra.mxu0 %v421
    %v466 = vpop.f32.mrf.mxu0
    %v467 = vadd.f32 %v447, %v466
    %468 = vmatmul.f32.gmra.mxu0 %v422
    %v469 = vpop.f32.mrf.mxu0
    %v470 = vadd.f32 %v447, %v469
    %471 = vmatmul.f32.gmra.mxu0 %v423
    %v472 = vpop.f32.mrf.mxu0
    %v473 = vadd.f32 %v447, %v472
    %474 = vmatmul.f32.gmra.mxu0 %v424
    %v475 = vpop.f32.mrf.mxu0
    %v476 = vadd.f32 %v447, %v475
    %477 = vmatmul.f32.gmra.mxu0 %v425
    %v478 = vpop.f32.mrf.mxu0
    %v479 = vadd.f32 %v447, %v478
    %480 = vmatmul.f32.gmra.mxu0 %v426
    %v481 = vpop.f32.mrf.mxu0
    %v482 = vadd.f32 %v447, %v481
    %483 = vdwg.mxu0
    %v484 = vmax.f32 %v467, 0.0
    %v485 = vmax.f32 %v470, 0.0
    %v486 = vmax.f32 %v473, 0.0
    %v487 = vmax.f32 %v476, 0.0
    %v488 = vmax.f32 %v479, 0.0
    %v489 = vmax.f32 %v482, 0.0
    %s490 = scalar_lea.vmem %s5, 512
    %v491 = vld [vmem:[%s490] sm:$0xff]
    %v492 = vld [vmem:[%s490 + $0x8] sm:$0xff]
    %v493 = vld [vmem:[%s490 + $0x10] sm:$0xff]
    %v494 = vld [vmem:[%s490 + $0x18] sm:$0xff]
    %v495 = vld [vmem:[%s490 + $0x20] sm:$0xff]
    %v496 = vld [vmem:[%s490 + $0x28] sm:$0xff]
    %v497 = vld [vmem:[%s490 + $0x30] sm:$0xff]
    %v498 = vld [vmem:[%s490 + $0x38] sm:$0xff]
    %v499 = vld [vmem:[%s490 + $0x40] sm:$0xff]
    %v500 = vld [vmem:[%s490 + $0x48] sm:$0xff]
    %v501 = vld [vmem:[%s490 + $0x50] sm:$0xff]
    %v502 = vld [vmem:[%s490 + $0x58] sm:$0xff]
    %v503 = vld [vmem:[%s490 + $0x60] sm:$0xff]
    %v504 = vld [vmem:[%s490 + $0x68] sm:$0xff]
    %v505 = vld [vmem:[%s490 + $0x70] sm:$0xff]
    %v506 = vld [vmem:[%s490 + $0x78] sm:$0xff]
    %s507 = scalar_lea.vmem %s6, 4
    %v508 = vld [vmem:[%s507] sm:$0x1]
    %v510 = vperm.slane %v508, 0
    %512 = vmatpush.msra.mxu0 %v506
    %513 = vmatpush.msra.mxu0 %v505
    %514 = vmatpush.msra.mxu0 %v504
    %515 = vmatpush.msra.mxu0 %v503
    %516 = vmatpush.msra.mxu0 %v502
    %517 = vmatpush.msra.mxu0 %v501
    %518 = vmatpush.msra.mxu0 %v500
    %519 = vmatpush.msra.mxu0 %v499
    %520 = vmatpush.msra.mxu0 %v498
    %521 = vmatpush.msra.mxu0 %v497
    %522 = vmatpush.msra.mxu0 %v496
    %523 = vmatpush.msra.mxu0 %v495
    %524 = vmatpush.msra.mxu0 %v494
    %525 = vmatpush.msra.mxu0 %v493
    %526 = vmatpush.msra.mxu0 %v492
    %527 = vmatpush.msra.mxu0 %v491
    %528 = vmatmul.f32.gmra.mxu0 %v484
    %v529 = vpop.f32.mrf.mxu0
    %v530 = vadd.f32 %v510, %v529
    %531 = vmatmul.f32.gmra.mxu0 %v485
    %v532 = vpop.f32.mrf.mxu0
    %v533 = vadd.f32 %v510, %v532
    %534 = vmatmul.f32.gmra.mxu0 %v486
    %v535 = vpop.f32.mrf.mxu0
    %v536 = vadd.f32 %v510, %v535
    %537 = vmatmul.f32.gmra.mxu0 %v487
    %v538 = vpop.f32.mrf.mxu0
    %v539 = vadd.f32 %v510, %v538
    %540 = vmatmul.f32.gmra.mxu0 %v488
    %v541 = vpop.f32.mrf.mxu0
    %v542 = vadd.f32 %v510, %v541
    %543 = vmatmul.f32.gmra.mxu0 %v489
    %v544 = vpop.f32.mrf.mxu0
    %v545 = vadd.f32 %v510, %v544
    %546 = vdwg.mxu0
    %v547 = vadd.f32 %v530, %v536
    %v548 = vadd.f32 %v547, %v542
    %v549 = vadd.f32 %v533, %v539
    %v550 = vadd.f32 %v549, %v545
    %v551 = vcvt.f32.s32.to.zero.pseudo %v48
    %v552 = vcvt.f32.s32.to.zero.pseudo %v49
    %vm553 = vcmp.eq.s32.totalorder %v551, 0
    %vm554 = vcmp.eq.s32.totalorder %v552, 0
    %v555 = vld [vmem:[%s2] sm:$0x1]
    %vm556 = vcmp.eq.s32.totalorder %v551, 1
    %vm557 = vcmp.eq.s32.totalorder %v552, 1
    %v558 = vld [vmem:[%s2 + $0x1] sm:$0x1]
    %vm559 = vcmp.eq.s32.totalorder %v551, 2
    %vm560 = vcmp.eq.s32.totalorder %v552, 2
    %v561 = vld [vmem:[%s2 + $0x2] sm:$0x1]
    %v562 = vld [vmem:[%s2 + $0x3] sm:$0x1]
    %v563 = vsel %vm559, 1, 0
    %v564 = vsel %vm560, 1, 0
    %565 = vset.pattern.permute.xlu0 0
    %566 = vperm.xlu0 %565, %v563
    %v567 = vpop.permute.xlu0 %566
    %568 = vset.pattern.permute.xlu0 0
    %569 = vperm.xlu0 %568, %v564
    %v570 = vpop.permute.xlu0 %569
    %vm571 = vcmp.eq.s32.totalorder %v567, 1
    %vm572 = vcmp.eq.s32.totalorder %v570, 1
    %v573 = vperm.slane %v561, 0
    %v574 = vperm.slane %v562, 0
    %v575 = vsel %vm571, %v573, %v574
    %v576 = vsel %vm572, %v573, %v574
    %v577 = vsel %vm556, 1, 0
    %v578 = vsel %vm557, 1, 0
    %579 = vset.pattern.permute.xlu0 0
    %580 = vperm.xlu0 %579, %v577
    %v581 = vpop.permute.xlu0 %580
    %582 = vset.pattern.permute.xlu0 0
    %583 = vperm.xlu0 %582, %v578
    %v584 = vpop.permute.xlu0 %583
    %vm585 = vcmp.eq.s32.totalorder %v581, 1
    %vm586 = vcmp.eq.s32.totalorder %v584, 1
    %v587 = vperm.slane %v558, 0
    %v588 = vsel %vm585, %v587, %v575
    %v589 = vsel %vm586, %v587, %v576
    %v590 = vsel %vm553, 1, 0
    %v591 = vsel %vm554, 1, 0
    %592 = vset.pattern.permute.xlu0 0
    %593 = vperm.xlu0 %592, %v590
    %v594 = vpop.permute.xlu0 %593
    %595 = vset.pattern.permute.xlu0 0
    %596 = vperm.xlu0 %595, %v591
    %v597 = vpop.permute.xlu0 %596
    %vm598 = vcmp.eq.s32.totalorder %v594, 1
    %vm599 = vcmp.eq.s32.totalorder %v597, 1
    %v600 = vperm.slane %v555, 0
    %v601 = vsel %vm598, %v600, %v588
    %v602 = vsel %vm599, %v600, %v589
    %v603 = vadd.f32 %v229, %v548
    %v604 = vadd.f32 %v232, %v550
    %v605 = vadd.f32 %v603, %v601
    %v606 = vadd.f32 %v604, %v602
    %v607 = vmax.f32 %v605, 0.0
    %v608 = vmax.f32 %v606, 0.0
    %v609 = vld [vmem:[#allocation2] sm:$0xff]
    %v610 = vld [vmem:[#allocation2 + $0x8] sm:$0xff]
    %v611 = vld [vmem:[#allocation2 + $0x10] sm:$0xff]
    %v612 = vld [vmem:[#allocation2 + $0x18] sm:$0xff]
    %v613 = vld [vmem:[#allocation2 + $0x20] sm:$0xff]
    %v614 = vld [vmem:[#allocation2 + $0x28] sm:$0xff]
    %v615 = vld [vmem:[#allocation2 + $0x30] sm:$0xff]
    %v616 = vld [vmem:[#allocation2 + $0x38] sm:$0xff]
    %v617 = vld [vmem:[#allocation2 + $0x40] sm:$0xff]
    %v618 = vld [vmem:[#allocation2 + $0x48] sm:$0xff]
    %v619 = vld [vmem:[#allocation2 + $0x50] sm:$0xff]
    %v620 = vld [vmem:[#allocation2 + $0x58] sm:$0xff]
    %v621 = vld [vmem:[#allocation2 + $0x60] sm:$0xff]
    %v622 = vld [vmem:[#allocation2 + $0x68] sm:$0xff]
    %v623 = vld [vmem:[#allocation2 + $0x70] sm:$0xff]
    %v624 = vld [vmem:[#allocation2 + $0x78] sm:$0xff]
    %v625 = vld [vmem:[%s8] sm:$0x1]
    %v627 = vperm.slane %v625, 0
    %629 = vmatpush.msra.mxu0 %v624
    %630 = vmatpush.msra.mxu0 %v623
    %631 = vmatpush.msra.mxu0 %v622
    %632 = vmatpush.msra.mxu0 %v621
    %633 = vmatpush.msra.mxu0 %v620
    %634 = vmatpush.msra.mxu0 %v619
    %635 = vmatpush.msra.mxu0 %v618
    %636 = vmatpush.msra.mxu0 %v617
    %637 = vmatpush.msra.mxu0 %v616
    %638 = vmatpush.msra.mxu0 %v615
    %639 = vmatpush.msra.mxu0 %v614
    %640 = vmatpush.msra.mxu0 %v613
    %641 = vmatpush.msra.mxu0 %v612
    %642 = vmatpush.msra.mxu0 %v611
    %643 = vmatpush.msra.mxu0 %v610
    %644 = vmatpush.msra.mxu0 %v609
    %645 = vmatmul.f32.gmra.mxu0 %v607
    %v646 = vpop.f32.mrf.mxu0
    %v647 = vadd.f32 %v627, %v646
    %648 = vmatmul.f32.gmra.mxu0 %v608
    %v649 = vpop.f32.mrf.mxu0
    %v650 = vadd.f32 %v627, %v649
    %651 = vdwg.mxu0
    %v652 = vmax.f32 %v647, 0.0
    %v653 = vmax.f32 %v650, 0.0
    %s654 = scalar_lea.vmem [#allocation2], 128
    %v655 = vld [vmem:[%s654] sm:$0xff]
    %v656 = vld [vmem:[%s654 + $0x8] sm:$0xff]
    %v657 = vld [vmem:[%s654 + $0x10] sm:$0xff]
    %v658 = vld [vmem:[%s654 + $0x18] sm:$0xff]
    %v659 = vld [vmem:[%s654 + $0x20] sm:$0xff]
    %v660 = vld [vmem:[%s654 + $0x28] sm:$0xff]
    %v661 = vld [vmem:[%s654 + $0x30] sm:$0xff]
    %v662 = vld [vmem:[%s654 + $0x38] sm:$0xff]
    %v663 = vld [vmem:[%s654 + $0x40] sm:$0xff]
    %v664 = vld [vmem:[%s654 + $0x48] sm:$0xff]
    %v665 = vld [vmem:[%s654 + $0x50] sm:$0xff]
    %v666 = vld [vmem:[%s654 + $0x58] sm:$0xff]
    %v667 = vld [vmem:[%s654 + $0x60] sm:$0xff]
    %v668 = vld [vmem:[%s654 + $0x68] sm:$0xff]
    %v669 = vld [vmem:[%s654 + $0x70] sm:$0xff]
    %v670 = vld [vmem:[%s654 + $0x78] sm:$0xff]
    %s671 = scalar_lea.vmem %s8, 1
    %v672 = vld [vmem:[%s671] sm:$0x1]
    %v674 = vperm.slane %v672, 0
    %676 = vmatpush.msra.mxu0 %v670
    %677 = vmatpush.msra.mxu0 %v669
    %678 = vmatpush.msra.mxu0 %v668
    %679 = vmatpush.msra.mxu0 %v667
    %680 = vmatpush.msra.mxu0 %v666
    %681 = vmatpush.msra.mxu0 %v665
    %682 = vmatpush.msra.mxu0 %v664
    %683 = vmatpush.msra.mxu0 %v663
    %684 = vmatpush.msra.mxu0 %v662
    %685 = vmatpush.msra.mxu0 %v661
    %686 = vmatpush.msra.mxu0 %v660
    %687 = vmatpush.msra.mxu0 %v659
    %688 = vmatpush.msra.mxu0 %v658
    %689 = vmatpush.msra.mxu0 %v657
    %690 = vmatpush.msra.mxu0 %v656
    %691 = vmatpush.msra.mxu0 %v655
    %692 = vmatmul.f32.gmra.mxu0 %v652
    %v693 = vpop.f32.mrf.mxu0
    %v694 = vadd.f32 %v674, %v693
    %695 = vmatmul.f32.gmra.mxu0 %v653
    %v696 = vpop.f32.mrf.mxu0
    %v697 = vadd.f32 %v674, %v696
    %698 = vdwg.mxu0
    %v699 = vmax.f32 %v694, 0.0
    %v700 = vmax.f32 %v697, 0.0
    %s701 = scalar_lea.vmem [#allocation2], 256
    %v702 = vld [vmem:[%s701] sm:$0xff]
    %v703 = vld [vmem:[%s701 + $0x8] sm:$0xff]
    %v704 = vld [vmem:[%s701 + $0x10] sm:$0xff]
    %v705 = vld [vmem:[%s701 + $0x18] sm:$0xff]
    %v706 = vld [vmem:[%s701 + $0x20] sm:$0xff]
    %v707 = vld [vmem:[%s701 + $0x28] sm:$0xff]
    %v708 = vld [vmem:[%s701 + $0x30] sm:$0xff]
    %v709 = vld [vmem:[%s701 + $0x38] sm:$0xff]
    %v710 = vld [vmem:[%s701 + $0x40] sm:$0xff]
    %v711 = vld [vmem:[%s701 + $0x48] sm:$0xff]
    %v712 = vld [vmem:[%s701 + $0x50] sm:$0xff]
    %v713 = vld [vmem:[%s701 + $0x58] sm:$0xff]
    %v714 = vld [vmem:[%s701 + $0x60] sm:$0xff]
    %v715 = vld [vmem:[%s701 + $0x68] sm:$0xff]
    %v716 = vld [vmem:[%s701 + $0x70] sm:$0xff]
    %v717 = vld [vmem:[%s701 + $0x78] sm:$0xff]
    %s718 = scalar_lea.vmem %s8, 2
    %v719 = vld [vmem:[%s718] sm:$0x1]
    %v721 = vperm.slane %v719, 0
    %723 = vmatpush.msra.mxu0 %v717
    %724 = vmatpush.msra.mxu0 %v716
    %725 = vmatpush.msra.mxu0 %v715
    %726 = vmatpush.msra.mxu0 %v714
    %727 = vmatpush.msra.mxu0 %v713
    %728 = vmatpush.msra.mxu0 %v712
    %729 = vmatpush.msra.mxu0 %v711
    %730 = vmatpush.msra.mxu0 %v710
    %731 = vmatpush.msra.mxu0 %v709
    %732 = vmatpush.msra.mxu0 %v708
    %733 = vmatpush.msra.mxu0 %v707
    %734 = vmatpush.msra.mxu0 %v706
    %735 = vmatpush.msra.mxu0 %v705
    %736 = vmatpush.msra.mxu0 %v704
    %737 = vmatpush.msra.mxu0 %v703
    %738 = vmatpush.msra.mxu0 %v702
    %739 = vmatmul.f32.gmra.mxu0 %v699
    %v740 = vpop.f32.mrf.mxu0
    %v741 = vadd.f32 %v721, %v740
    %742 = vmatmul.f32.gmra.mxu0 %v700
    %v743 = vpop.f32.mrf.mxu0
    %v744 = vadd.f32 %v721, %v743
    %745 = vdwg.mxu0
    %v746 = vmax.f32 %v741, 0.0
    %v747 = vmax.f32 %v744, 0.0
    %s748 = scalar_lea.vmem [#allocation2], 384
    %v749 = vld [vmem:[%s748] sm:$0xff]
    %v750 = vld [vmem:[%s748 + $0x8] sm:$0xff]
    %v751 = vld [vmem:[%s748 + $0x10] sm:$0xff]
    %v752 = vld [vmem:[%s748 + $0x18] sm:$0xff]
    %v753 = vld [vmem:[%s748 + $0x20] sm:$0xff]
    %v754 = vld [vmem:[%s748 + $0x28] sm:$0xff]
    %v755 = vld [vmem:[%s748 + $0x30] sm:$0xff]
    %v756 = vld [vmem:[%s748 + $0x38] sm:$0xff]
    %v757 = vld [vmem:[%s748 + $0x40] sm:$0xff]
    %v758 = vld [vmem:[%s748 + $0x48] sm:$0xff]
    %v759 = vld [vmem:[%s748 + $0x50] sm:$0xff]
    %v760 = vld [vmem:[%s748 + $0x58] sm:$0xff]
    %v761 = vld [vmem:[%s748 + $0x60] sm:$0xff]
    %v762 = vld [vmem:[%s748 + $0x68] sm:$0xff]
    %v763 = vld [vmem:[%s748 + $0x70] sm:$0xff]
    %v764 = vld [vmem:[%s748 + $0x78] sm:$0xff]
    %s765 = scalar_lea.vmem %s8, 3
    %v766 = vld [vmem:[%s765] sm:$0x1]
    %v768 = vperm.slane %v766, 0
    %770 = vmatpush.msra.mxu0 %v764
    %771 = vmatpush.msra.mxu0 %v763
    %772 = vmatpush.msra.mxu0 %v762
    %773 = vmatpush.msra.mxu0 %v761
    %774 = vmatpush.msra.mxu0 %v760
    %775 = vmatpush.msra.mxu0 %v759
    %776 = vmatpush.msra.mxu0 %v758
    %777 = vmatpush.msra.mxu0 %v757
    %778 = vmatpush.msra.mxu0 %v756
    %779 = vmatpush.msra.mxu0 %v755
    %780 = vmatpush.msra.mxu0 %v754
    %781 = vmatpush.msra.mxu0 %v753
    %782 = vmatpush.msra.mxu0 %v752
    %783 = vmatpush.msra.mxu0 %v751
    %784 = vmatpush.msra.mxu0 %v750
    %785 = vmatpush.msra.mxu0 %v749
    %786 = vmatmul.f32.gmra.mxu0 %v746
    %v787 = vpop.f32.mrf.mxu0
    %v788 = vadd.f32 %v768, %v787
    %789 = vmatmul.f32.gmra.mxu0 %v747
    %v790 = vpop.f32.mrf.mxu0
    %v791 = vadd.f32 %v768, %v790
    %792 = vdwg.mxu0
    %795 = vrot.lane.b32.xlu0 %v48, 4
    %v796 = vpop.permute.xlu0 %795
    %797 = vrot.lane.b32.xlu0 %v49, 4
    %v798 = vpop.permute.xlu0 %797
    %v801 = vadd.f32 %v48, %v796
    %v802 = vadd.f32 %v49, %v798
    %805 = vrot.lane.b32.xlu0 %v801, 123
    %v806 = vpop.permute.xlu0 %805
    %807 = vrot.lane.b32.xlu0 %v802, 123
    %v808 = vpop.permute.xlu0 %807
    %vm811 = vcmp.le.f32.partialorder %v48, %v806
    %vm812 = vcmp.le.f32.partialorder %v49, %v808
    %v813 = vlaneseq
    %v814 = vand.u32 %v813, 127
    %vm815 = vcmp.eq.s32.totalorder %v814, 2
    %v816 = vsel %vm811, 1, 0
    %v817 = vsel %vm812, 1, 0
    %818 = vset.pattern.permute.xlu0 1
    %819 = vperm.xlu0 %818, %v816
    %v820 = vpop.permute.xlu0 %819
    %821 = vset.pattern.permute.xlu0 1
    %822 = vperm.xlu0 %821, %v817
    %v823 = vpop.permute.xlu0 %822
    %vm824 = vcmp.eq.s32.totalorder %v820, 1
    %vm825 = vcmp.eq.s32.totalorder %v823, 1
    %vm826 = vmand %vm815, %vm824
    %vm827 = vmand %vm815, %vm825
    %v828 = vsel %vm826, -1e+10, %v788
    %v829 = vsel %vm827, -1e+10, %v791
    %830 = vset.pattern.permute.xlu0 6
    %831 = vperm.xlu0 %830, %v801
    %v832 = vpop.permute.xlu0 %831
    %834 = vset.pattern.permute.xlu0 6
    %835 = vperm.xlu0 %834, %v802
    %v836 = vpop.permute.xlu0 %835
    %v838 = vmax.f32 %v828, %v832
    %v839 = vmax.f32 %v829, %v836
    %840 = vset.pattern.permute.xlu0 1
    %841 = vperm.xlu0 %840, %v48
    %v842 = vpop.permute.xlu0 %841
    %844 = vset.pattern.permute.xlu0 1
    %845 = vperm.xlu0 %844, %v49
    %v846 = vpop.permute.xlu0 %845
    %v848 = vmin.f32 %v838, %v842
    %v849 = vmin.f32 %v839, %v846
    %vm850 = vcmp.eq.s32.totalorder %v814, 3
    %v851 = vsel %vm850, %v848, %v828
    %v852 = vsel %vm850, %v849, %v829
    %853 = vst [vmem:[%s9] sm:$0xff] %v851
    %854 = vst [vmem:[%s9 + $0x8] sm:$0xff] %v852
    // Predicated region
    $region42: #{poker_forward.1} parent=1 // pred_check
      _
    $region43: #{poker_forward.1} parent=1 // pred_check_branch
      %856 = sbr.rel (0) target = $region45
    $region44: #{poker_forward.1} parent=1 // pred_region
      _
    $region45: #{poker_forward.1} parent=1 // pred_fallthru
      _
    // Predicated region
    $region46: #{poker_forward.1} parent=1 // pred_check
      _
    $region47: #{poker_forward.1} parent=1 // pred_check_branch
      %858 = sbr.rel (0) target = $region49
    $region48: #{poker_forward.1} parent=1 // pred_region
      _
    $region49: #{poker_forward.1} parent=1 // pred_fallthru
      _
    %859 = vsyncpa [#allocation3], 1

</llo_original>
